<compile_context>
chip_gen: v5e
topology: v5e:2x2
jax: 0.10.0
libtpu: 0.0.40
codegen_flags: <defaults>
</compile_context>

<pallas_src>
import functools

import jax
import jax.numpy as jnp
from jax import lax
from jax.experimental import pallas as pl
from jax.experimental.pallas import tpu as pltpu

BN_EPS = 1e-5


def fold_bn(gamma, beta, mean, var):
    scale = gamma / jnp.sqrt(var + BN_EPS)
    shift = beta - mean * scale
    return scale, shift


# ----------------------------- Pallas kernels ------------------------------

def _make_conv1_kernel(n, wo, hp, stride, n_ph, c_in, c_mid, has_sc):
    """conv1 (3x3, stride s) fused with bn1/relu1 prologue, bn2/relu2 epilogue
    and the 1x1 shortcut (+ folded residual bias) on the centre tap.  grid = (Ho,)."""
    nw = n * wo
    n_xb = 3 * n_ph

    def kernel(*refs):
        xb = refs[:n_xb]                                   # padded input rows (f32)
        (wm_ref, w_ref, s1_ref, t1_ref,
         es_ref, et_ref, rb_ref) = refs[n_xb:n_xb + 7]
        pos = n_xb + 7
        if has_sc:
            ws_ref = refs[pos]
            pos += 1
        a2_ref, sc_ref = refs[pos], refs[pos + 1]

        i = pl.program_id(0)
        s1 = s1_ref[...]
        t1 = t1_ref[...]
        acc = jnp.zeros((nw, c_mid), jnp.float32)

        for kh in range(3):
            row = i * stride + kh                          # padded H index being read
            row_ok = jnp.logical_and(row >= 1, row <= hp - 2).astype(jnp.float32)
            # bn1 + relu1 prologue on the phase rows for this kh; the (column-mask *
            # row-validity) product is formed once on the small (1, wk, Cin) mask and
            # restores exact zero padding of the *activated* input.
            acts = []
            for ph in range(n_ph):
                msk = wm_ref[ph] * row_ok                  # (1, wk, c_in)
                xv = xb[kh * n_ph + ph][...]               # (n, wk, c_in) f32
                av = jnp.maximum(xv * s1 + t1, 0.0) * msk
                acts.append(av)
            for kw in range(3):
                ph = kw % stride
                start = kw // stride
                a_tap = acts[ph][:, start:start + wo, :]   # (n, wo, c_in) f32
                ab = a_tap.astype(jnp.bfloat16).reshape(nw, c_in)
                acc = acc + jnp.dot(ab, w_ref[kh * 3 + kw],
                                    preferred_element_type=jnp.float32)
                if kh == 1 and kw == 1:                    # centre tap == shortcut input
                    if has_sc:
                        sc_ref[...] = (jnp.dot(ab, ws_ref[...],
                                               preferred_element_type=jnp.float32)
                                       + rb_ref[...])
                    else:
                        sc_ref[...] = a_tap.reshape(nw, c_in) + rb_ref[...]

        # epilogue: conv1 bias + bn2 folded into (es, et), then relu2; store bf16.
        a2_ref[...] = jnp.maximum(acc * es_ref[...] + et_ref[...], 0.0
                                  ).astype(a2_ref.dtype)

    return kernel


def _make_conv2_kernel(n, wo, c_mid, c_out):
    """conv2 (3x3, stride 1) + residual add (biases pre-folded into the residual).
    grid = (Ho,)."""
    nw = n * wo

    def kernel(x0_ref, x1_ref, x2_ref, w_ref, r_ref, o_ref):
        acc = r_ref[...]                                   # residual (+ folded biases)
        for kh, x_ref in enumerate((x0_ref, x1_ref, x2_ref)):
            xrow = x_ref[...]                              # (n, wo + 2, c_mid) bf16
            for kw in range(3):
                xs = xrow[:, kw:kw + wo, :].reshape(nw, c_mid)
                acc = acc + jnp.dot(xs, w_ref[kh * 3 + kw],
                                    preferred_element_type=jnp.float32)
        o_ref[...] = acc.astype(o_ref.dtype)

    return kernel


# ------------------------------ forward glue --------------------------------

@functools.partial(jax.jit, static_argnames=("stride", "out_channels"))
def preact_block_forward(x_nchw, params, stride, out_channels):
    expansion = 1
    n, c_in, h, w = x_nchw.shape
    c_mid = out_channels
    c_out = expansion * out_channels
    ho = (h - 1) // stride + 1
    wo = (w - 1) // stride + 1
    nw = n * wo
    hp, wp = h + 2, w + 2
    has_sc = (stride != 1) or (c_in != c_out)

    # layout: NCHW -> (H, N, W, C), zero-pad spatially.
    x_h = jnp.transpose(x_nchw, (2, 0, 3, 1)).astype(jnp.float32)    # (H, N, W, Cin)
    xpad = jnp.pad(x_h, ((1, 1), (0, 0), (1, 1), (0, 0)))            # (Hp, N, Wp, Cin)

    # fold eval-mode BatchNorms into per-channel scale/shift (kept in f32).
    s1, t1 = fold_bn(*params["bn1"])
    s2, t2 = fold_bn(*params["bn2"])
    s1r = s1.reshape(1, c_in)
    t1r = t1.reshape(1, c_in)
    es = s2.reshape(1, c_mid)                          # bn2 scale
    et = (s2 * params["b1"] + t2).reshape(1, c_mid)    # bn2 shift with conv1 bias folded

    # weights in tap-major (9, Cin, Cout) layout, bf16 for the MXU.
    w1t = jnp.transpose(params["w1"], (2, 3, 1, 0)).reshape(9, c_in, c_mid)
    w1t = w1t.astype(jnp.bfloat16)
    w2t = jnp.transpose(params["w2"], (2, 3, 1, 0)).reshape(9, c_mid, c_out)
    w2t = w2t.astype(jnp.bfloat16)

    # residual bias: conv2 bias (+ shortcut bias for the projection case) folded once
    # into the residual tensor kernel 1 emits, so kernel 2's epilogue is a pure add.
    if has_sc:
        rb = (params["bs"] + params["b2"]).reshape(1, c_out).astype(jnp.float32)
    else:
        rb = params["b2"].reshape(1, c_out).astype(jnp.float32)

    # stride "phases" of the padded input: a tap (kh, kw) of the strided conv reads
    # phase kw % stride at column offset kw // stride -> the kernel only ever needs
    # static, contiguous column slices (no im2col, no strided in-kernel loads).
    n_ph = min(stride, 3)
    wk = wo + (2 // stride)
    if stride == 1:
        xk = xpad[None]                                              # (1, Hp, N, Wp, Cin)
    else:
        phases = []
        for p in range(n_ph):
            v = xpad[:, :, p::stride, :][:, :, :wk, :]
            if v.shape[2] < wk:
                v = jnp.pad(v, ((0, 0), (0, 0), (0, wk - v.shape[2]), (0, 0)))
            phases.append(v)
        xk = jnp.stack(phases)                                       # (n_ph, Hp, N, wk, Cin)

    # per-phase column-validity mask (zero at the spatial padding columns), so the
    # in-kernel bn1/relu1 prologue reproduces exact zero padding of the activation.
    col = jnp.arange(wp)
    colv = jnp.logical_and(col >= 1, col <= w).astype(jnp.float32)
    wm_rows = []
    for p in range(n_ph):
        v = colv[p::stride][:wk]
        if v.shape[0] < wk:
            v = jnp.pad(v, (0, wk - v.shape[0]))
        wm_rows.append(v)
    wm = jnp.broadcast_to(jnp.stack(wm_rows).reshape(n_ph, 1, wk, 1),
                          (n_ph, 1, wk, c_in))

    # NOTE: per-step blocks are a few MB even at ResNet sizes; for very wide channel
    # counts raise vmem_limit_bytes further / shrink the per-row block.
    cparams = pltpu.CompilerParams(dimension_semantics=("parallel",),
                                   vmem_limit_bytes=64 * 1024 * 1024)

    # ---- kernel 1: conv1 + bn1/relu1 prologue + bn2/relu2 epilogue + shortcut ----
    x_specs = [
        pl.BlockSpec((None, None, n, wk, c_in),
                     (lambda i, ph=ph, kh=kh: (ph, i * stride + kh, 0, 0, 0)))
        for kh in range(3) for ph in range(n_ph)
    ]
    in_specs = x_specs + [
        pl.BlockSpec((n_ph, 1, wk, c_in), lambda i: (0, 0, 0, 0)),   # pad mask
        pl.BlockSpec((9, c_in, c_mid), lambda i: (0, 0, 0)),         # conv1 weights
        pl.BlockSpec((1, c_in), lambda i: (0, 0)),                   # bn1 scale
        pl.BlockSpec((1, c_in), lambda i: (0, 0)),                   # bn1 shift
        pl.BlockSpec((1, c_mid), lambda i: (0, 0)),                  # bn2 scale
        pl.BlockSpec((1, c_mid), lambda i: (0, 0)),                  # bn2 shift (+b1)
        pl.BlockSpec((1, c_out), lambda i: (0, 0)),                  # residual bias
    ]
    args = [xk] * (3 * n_ph) + [wm, w1t, s1r, t1r, es, et, rb]
    if has_sc:
        ws = params["ws"].reshape(c_out, c_in).T.astype(jnp.bfloat16)
        in_specs += [pl.BlockSpec((c_in, c_out), lambda i: (0, 0))]  # 1x1 shortcut w
        args += [ws]

    a2, sc = pl.pallas_call(
        _make_conv1_kernel(n, wo, hp, stride, n_ph, c_in, c_mid, has_sc),
        out_shape=(jax.ShapeDtypeStruct((ho, nw, c_mid), jnp.bfloat16),
                   jax.ShapeDtypeStruct((ho, nw, c_out), jnp.float32)),
        grid=(ho,),
        in_specs=in_specs,
        out_specs=(pl.BlockSpec((None, nw, c_mid), lambda i: (i, 0, 0)),
                   pl.BlockSpec((None, nw, c_out), lambda i: (i, 0, 0))),
        compiler_params=cparams,
    )(*args)

    # ---- kernel 2: conv2 + residual add ------------------------------------------
    a2pad = jnp.pad(a2.reshape(ho, n, wo, c_mid),
                    ((1, 1), (0, 0), (1, 1), (0, 0)))                # bf16, zero pad
    x2_specs = [
        pl.BlockSpec((None, n, wo + 2, c_mid),
                     (lambda i, kh=kh: (i + kh, 0, 0, 0)))
        for kh in range(3)
    ]
    out = pl.pallas_call(
        _make_conv2_kernel(n, wo, c_mid, c_out),
        out_shape=jax.ShapeDtypeStruct((ho, nw, c_out), jnp.float32),
        grid=(ho,),
        in_specs=x2_specs + [
            pl.BlockSpec((9, c_mid, c_out), lambda i: (0, 0, 0)),    # conv2 weights
            pl.BlockSpec((None, nw, c_out), lambda i: (i, 0, 0)),    # residual (+biases)
        ],
        out_specs=pl.BlockSpec((None, nw, c_out), lambda i: (i, 0, 0)),
        compiler_params=cparams,
    )(a2pad, a2pad, a2pad, w2t, sc)

    out = out.reshape(ho, n, wo, c_out)
    return jnp.transpose(out, (1, 3, 0, 2))                          # back to NCHW


# ------------------------------ params & reference ---------------------------

def init_params(key, in_channels, out_channels, expansion=1):
    c_in, c_mid, c_out = in_channels, out_channels, expansion * out_channels
    ks = jax.random.split(key, 8)

    def bn(k, ch):
        k1, k2, k3, k4 = jax.random.split(k, 4)
        gamma = 1.0 + 0.1 * jax.random.normal(k1, (ch,), jnp.float32)
        beta = 0.1 * jax.random.normal(k2, (ch,), jnp.float32)
        mean = 0.1 * jax.random.normal(k3, (ch,), jnp.float32)
        var = jnp.abs(1.0 + 0.1 * jax.random.normal(k4, (ch,), jnp.float32))
        return gamma, beta, mean, var

    p = {}
    p["bn1"] = bn(ks[0], c_in)
    p["bn2"] = bn(ks[1], c_mid)
    p["w1"] = 0.2 * jax.random.normal(ks[2], (c_mid, c_in, 3, 3), jnp.float32)
    p["b1"] = 0.05 * jax.random.normal(ks[3], (c_mid,), jnp.float32)
    p["w2"] = 0.2 * jax.random.normal(ks[4], (c_out, c_mid, 3, 3), jnp.float32)
    p["b2"] = 0.05 * jax.random.normal(ks[5], (c_out,), jnp.float32)
    p["ws"] = 0.2 * jax.random.normal(ks[6], (c_out, c_in, 1, 1), jnp.float32)
    p["bs"] = 0.05 * jax.random.normal(ks[7], (c_out,), jnp.float32)
    return p


def reference_forward(x, params, stride, out_channels):
    """Plain-XLA reference with the same bf16 matmul-operand rounding as the kernels."""
    expansion = 1
    c_in = x.shape[1]
    c_out = expansion * out_channels
    s1, t1 = fold_bn(*params["bn1"])
    s2, t2 = fold_bn(*params["bn2"])

    def bnact(v, s, t):
        return jnp.maximum(v * s[None, :, None, None] + t[None, :, None, None], 0.0)

    def conv(v, wgt, b, s, p):
        vb = v.astype(jnp.bfloat16).astype(jnp.float32)
        wb = wgt.astype(jnp.bfloat16).astype(jnp.float32)
        y = lax.conv_general_dilated(vb, wb, (s, s), [(p, p), (p, p)],
                                     dimension_numbers=("NCHW", "OIHW", "NCHW"))
        return y + b[None, :, None, None]

    h = bnact(x, s1, t1)
    o1 = conv(h, params["w1"], params["b1"], stride, 1)
    a2 = bnact(o1, s2, t2)
    o2 = conv(a2, params["w2"], params["b2"], 1, 1)
    if stride != 1 or c_in != c_out:
        sc = conv(h, params["ws"], params["bs"], stride, 0)
    else:
        sc = h
    return o2 + sc


# --------------------------------- main ---------------------------------------

if __name__ == "__main__":
    key = jax.random.PRNGKey(0)
    configs = [
        # (N, C_in, H, W, out_channels, stride)
        (2, 4, 16, 16, 8, 1),    # projection shortcut (channel change)
        (2, 8, 16, 16, 8, 2),    # projection shortcut (stride 2)
        (2, 8, 16, 16, 8, 1),    # identity shortcut
    ]
    for idx, (n, c_in, h, w, oc, stride) in enumerate(configs):
        kx, kp = jax.random.split(jax.random.fold_in(key, idx))
        x = jax.random.normal(kx, (n, c_in, h, w), jnp.float32)   # NCHW like PyTorch
        params = init_params(kp, c_in, oc)

        out = jax.block_until_ready(preact_block_forward(x, params, stride, oc))
        ref = jax.block_until_ready(reference_forward(x, params, stride, oc))

        ho = (h - 1) // stride + 1
        wo = (w - 1) // stride + 1
        assert out.shape == (n, oc, ho, wo), out.shape
        err = float(jnp.max(jnp.abs(out - ref)))
        assert jnp.allclose(out, ref, atol=2e-2, rtol=2e-2), f"max abs err {err}"

    print("KERNEL_OK")
</pallas_src>

<mosaic_0001>
module attributes {stable_mosaic.version = 11 : i64} {
  func.func @kernel(%arg0: i32, %arg1: memref<1x1x2x18x4xf32, #tpu.memory_space<vmem>>, %arg2: memref<1x1x2x18x4xf32, #tpu.memory_space<vmem>>, %arg3: memref<1x1x2x18x4xf32, #tpu.memory_space<vmem>>, %arg4: memref<1x1x18x4xf32, #tpu.memory_space<vmem>>, %arg5: memref<9x4x8xbf16, #tpu.memory_space<vmem>>, %arg6: memref<1x4xf32, #tpu.memory_space<vmem>>, %arg7: memref<1x4xf32, #tpu.memory_space<vmem>>, %arg8: memref<1x8xf32, #tpu.memory_space<vmem>>, %arg9: memref<1x8xf32, #tpu.memory_space<vmem>>, %arg10: memref<1x8xf32, #tpu.memory_space<vmem>>, %arg11: memref<4x8xbf16, #tpu.memory_space<vmem>>, %arg12: memref<1x32x8xbf16, #tpu.memory_space<vmem>>, %arg13: memref<1x32x8xf32, #tpu.memory_space<vmem>>) attributes {dimension_semantics = [#tpu.dimension_semantics<parallel>], iteration_bounds = array<i64: 16>, scalar_prefetch = 0 : i64, scratch_operands = 0 : i64, tpu.core_type = #tpu.core_type<tc>, window_params = [{transform_indices = @transform_0, window_bounds = array<i64: 1, 1, 2, 18, 4>}, {transform_indices = @transform_1, window_bounds = array<i64: 1, 1, 2, 18, 4>}, {transform_indices = @transform_2, window_bounds = array<i64: 1, 1, 2, 18, 4>}, {pipeline_mode = #tpu.pipeline_mode<synchronous>, transform_indices = @transform_3, window_bounds = array<i64: 1, 1, 18, 4>}, {pipeline_mode = #tpu.pipeline_mode<synchronous>, transform_indices = @transform_4, window_bounds = array<i64: 9, 4, 8>}, {pipeline_mode = #tpu.pipeline_mode<synchronous>, transform_indices = @transform_5, window_bounds = array<i64: 1, 4>}, {pipeline_mode = #tpu.pipeline_mode<synchronous>, transform_indices = @transform_6, window_bounds = array<i64: 1, 4>}, {pipeline_mode = #tpu.pipeline_mode<synchronous>, transform_indices = @transform_7, window_bounds = array<i64: 1, 8>}, {pipeline_mode = #tpu.pipeline_mode<synchronous>, transform_indices = @transform_8, window_bounds = array<i64: 1, 8>}, {pipeline_mode = #tpu.pipeline_mode<synchronous>, transform_indices = @transform_9, window_bounds = array<i64: 1, 8>}, {pipeline_mode = #tpu.pipeline_mode<synchronous>, transform_indices = @transform_10, window_bounds = array<i64: 4, 8>}, {transform_indices = @transform_11, window_bounds = array<i64: 1, 32, 8>}, {transform_indices = @transform_12, window_bounds = array<i64: 1, 32, 8>}]} {
    %c0 = arith.constant 0 : index
    %c0_0 = arith.constant 0 : index
    %0 = vector.load %arg6[%c0, %c0_0] : memref<1x4xf32, #tpu.memory_space<vmem>>, vector<1x4xf32>
    %c0_1 = arith.constant 0 : index
    %c0_2 = arith.constant 0 : index
    %1 = vector.load %arg7[%c0_1, %c0_2] : memref<1x4xf32, #tpu.memory_space<vmem>>, vector<1x4xf32>
    %cst = arith.constant 0.000000e+00 : f32
    %2 = vector.broadcast %cst : f32 to vector<32x8xf32>
    %c1_i32 = arith.constant 1 : i32
    %3 = arith.muli %arg0, %c1_i32 : i32
    %c0_i32 = arith.constant 0 : i32
    %4 = arith.addi %3, %c0_i32 : i32
    %c1_i32_3 = arith.constant 1 : i32
    %5 = arith.cmpi sge, %4, %c1_i32_3 : i32
    %c16_i32 = arith.constant 16 : i32
    %6 = arith.cmpi sle, %4, %c16_i32 : i32
    %7 = arith.andi %5, %6 : i1
    %8 = arith.extui %7 : i1 to i32
    %9 = arith.sitofp %8 : i32 to f32
    %c0_4 = arith.constant 0 : index
    %c0_5 = arith.constant 0 : index
    %c0_6 = arith.constant 0 : index
    %c0_7 = arith.constant 0 : index
    %10 = vector.load %arg4[%c0_4, %c0_5, %c0_6, %c0_7] : memref<1x1x18x4xf32, #tpu.memory_space<vmem>>, vector<1x1x18x4xf32>
    %11 = vector.shape_cast %10 : vector<1x1x18x4xf32> to vector<1x18x4xf32>
    %12 = vector.broadcast %9 : f32 to vector<1x18x4xf32>
    %13 = arith.mulf %11, %12 : vector<1x18x4xf32>
    %c0_8 = arith.constant 0 : index
    %c0_9 = arith.constant 0 : index
    %c0_10 = arith.constant 0 : index
    %c0_11 = arith.constant 0 : index
    %c0_12 = arith.constant 0 : index
    %14 = vector.load %arg1[%c0_8, %c0_9, %c0_10, %c0_11, %c0_12] : memref<1x1x2x18x4xf32, #tpu.memory_space<vmem>>, vector<1x1x2x18x4xf32>
    %15 = vector.shape_cast %14 : vector<1x1x2x18x4xf32> to vector<2x18x4xf32>
    %16 = vector.shape_cast %0 : vector<1x4xf32> to vector<1x1x4xf32>
    %17 = vector.broadcast %16 : vector<1x1x4xf32> to vector<2x18x4xf32>
    %18 = arith.mulf %15, %17 : vector<2x18x4xf32>
    %19 = vector.shape_cast %1 : vector<1x4xf32> to vector<1x1x4xf32>
    %20 = vector.broadcast %19 : vector<1x1x4xf32> to vector<2x18x4xf32>
    %21 = arith.addf %18, %20 : vector<2x18x4xf32>
    %cst_13 = arith.constant 0.000000e+00 : f32
    %22 = vector.broadcast %cst_13 : f32 to vector<2x18x4xf32>
    %23 = arith.maximumf %21, %22 : vector<2x18x4xf32>
    %24 = vector.broadcast %13 : vector<1x18x4xf32> to vector<2x18x4xf32>
    %25 = arith.mulf %23, %24 : vector<2x18x4xf32>
    %26 = vector.extract_strided_slice %25 {offsets = [0, 0, 0], sizes = [2, 16, 4], strides = [1, 1, 1]} : vector<2x18x4xf32> to vector<2x16x4xf32>
    %27 = arith.truncf %26 : vector<2x16x4xf32> to vector<2x16x4xbf16>
    %28 = vector.shape_cast %27 : vector<2x16x4xbf16> to vector<32x4xbf16>
    %c0_14 = arith.constant 0 : index
    %c0_15 = arith.constant 0 : index
    %c0_16 = arith.constant 0 : index
    %29 = vector.load %arg5[%c0_14, %c0_15, %c0_16] : memref<9x4x8xbf16, #tpu.memory_space<vmem>>, vector<1x4x8xbf16>
    %30 = vector.shape_cast %29 : vector<1x4x8xbf16> to vector<4x8xbf16>
    %cst_17 = arith.constant dense<0.000000e+00> : vector<32x8xf32>
    %31 = tpu.matmul %28, %30, %cst_17 {dimension_numbers = #tpu.dot_dimension_numbers<[1], [0], [0], [1], [0, 0, 1, 1], [], []>} : vector<32x4xbf16>, vector<4x8xbf16>, vector<32x8xf32> -> vector<32x8xf32>
    %32 = arith.addf %2, %31 : vector<32x8xf32>
    %33 = vector.extract_strided_slice %25 {offsets = [0, 1, 0], sizes = [2, 16, 4], strides = [1, 1, 1]} : vector<2x18x4xf32> to vector<2x16x4xf32>
    %34 = arith.truncf %33 : vector<2x16x4xf32> to vector<2x16x4xbf16>
    %35 = vector.shape_cast %34 : vector<2x16x4xbf16> to vector<32x4xbf16>
    %c1 = arith.constant 1 : index
    %c0_18 = arith.constant 0 : index
    %c0_19 = arith.constant 0 : index
    %36 = vector.load %arg5[%c1, %c0_18, %c0_19] : memref<9x4x8xbf16, #tpu.memory_space<vmem>>, vector<1x4x8xbf16>
    %37 = vector.shape_cast %36 : vector<1x4x8xbf16> to vector<4x8xbf16>
    %cst_20 = arith.constant dense<0.000000e+00> : vector<32x8xf32>
    %38 = tpu.matmul %35, %37, %cst_20 {dimension_numbers = #tpu.dot_dimension_numbers<[1], [0], [0], [1], [0, 0, 1, 1], [], []>} : vector<32x4xbf16>, vector<4x8xbf16>, vector<32x8xf32> -> vector<32x8xf32>
    %39 = arith.addf %32, %38 : vector<32x8xf32>
    %40 = vector.extract_strided_slice %25 {offsets = [0, 2, 0], sizes = [2, 16, 4], strides = [1, 1, 1]} : vector<2x18x4xf32> to vector<2x16x4xf32>
    %41 = arith.truncf %40 : vector<2x16x4xf32> to vector<2x16x4xbf16>
    %42 = vector.shape_cast %41 : vector<2x16x4xbf16> to vector<32x4xbf16>
    %c2 = arith.constant 2 : index
    %c0_21 = arith.constant 0 : index
    %c0_22 = arith.constant 0 : index
    %43 = vector.load %arg5[%c2, %c0_21, %c0_22] : memref<9x4x8xbf16, #tpu.memory_space<vmem>>, vector<1x4x8xbf16>
    %44 = vector.shape_cast %43 : vector<1x4x8xbf16> to vector<4x8xbf16>
    %cst_23 = arith.constant dense<0.000000e+00> : vector<32x8xf32>
    %45 = tpu.matmul %42, %44, %cst_23 {dimension_numbers = #tpu.dot_dimension_numbers<[1], [0], [0], [1], [0, 0, 1, 1], [], []>} : vector<32x4xbf16>, vector<4x8xbf16>, vector<32x8xf32> -> vector<32x8xf32>
    %46 = arith.addf %39, %45 : vector<32x8xf32>
    %c1_i32_24 = arith.constant 1 : i32
    %47 = arith.muli %arg0, %c1_i32_24 : i32
    %c1_i32_25 = arith.constant 1 : i32
    %48 = arith.addi %47, %c1_i32_25 : i32
    %c1_i32_26 = arith.constant 1 : i32
    %49 = arith.cmpi sge, %48, %c1_i32_26 : i32
    %c16_i32_27 = arith.constant 16 : i32
    %50 = arith.cmpi sle, %48, %c16_i32_27 : i32
    %51 = arith.andi %49, %50 : i1
    %52 = arith.extui %51 : i1 to i32
    %53 = arith.sitofp %52 : i32 to f32
    %c0_28 = arith.constant 0 : index
    %c0_29 = arith.constant 0 : index
    %c0_30 = arith.constant 0 : index
    %c0_31 = arith.constant 0 : index
    %54 = vector.load %arg4[%c0_28, %c0_29, %c0_30, %c0_31] : memref<1x1x18x4xf32, #tpu.memory_space<vmem>>, vector<1x1x18x4xf32>
    %55 = vector.shape_cast %54 : vector<1x1x18x4xf32> to vector<1x18x4xf32>
    %56 = vector.broadcast %53 : f32 to vector<1x18x4xf32>
    %57 = arith.mulf %55, %56 : vector<1x18x4xf32>
    %c0_32 = arith.constant 0 : index
    %c0_33 = arith.constant 0 : index
    %c0_34 = arith.constant 0 : index
    %c0_35 = arith.constant 0 : index
    %c0_36 = arith.constant 0 : index
    %58 = vector.load %arg2[%c0_32, %c0_33, %c0_34, %c0_35, %c0_36] : memref<1x1x2x18x4xf32, #tpu.memory_space<vmem>>, vector<1x1x2x18x4xf32>
    %59 = vector.shape_cast %58 : vector<1x1x2x18x4xf32> to vector<2x18x4xf32>
    %60 = vector.shape_cast %0 : vector<1x4xf32> to vector<1x1x4xf32>
    %61 = vector.broadcast %60 : vector<1x1x4xf32> to vector<2x18x4xf32>
    %62 = arith.mulf %59, %61 : vector<2x18x4xf32>
    %63 = vector.shape_cast %1 : vector<1x4xf32> to vector<1x1x4xf32>
    %64 = vector.broadcast %63 : vector<1x1x4xf32> to vector<2x18x4xf32>
    %65 = arith.addf %62, %64 : vector<2x18x4xf32>
    %cst_37 = arith.constant 0.000000e+00 : f32
    %66 = vector.broadcast %cst_37 : f32 to vector<2x18x4xf32>
    %67 = arith.maximumf %65, %66 : vector<2x18x4xf32>
    %68 = vector.broadcast %57 : vector<1x18x4xf32> to vector<2x18x4xf32>
    %69 = arith.mulf %67, %68 : vector<2x18x4xf32>
    %70 = vector.extract_strided_slice %69 {offsets = [0, 0, 0], sizes = [2, 16, 4], strides = [1, 1, 1]} : vector<2x18x4xf32> to vector<2x16x4xf32>
    %71 = arith.truncf %70 : vector<2x16x4xf32> to vector<2x16x4xbf16>
    %72 = vector.shape_cast %71 : vector<2x16x4xbf16> to vector<32x4xbf16>
    %c3 = arith.constant 3 : index
    %c0_38 = arith.constant 0 : index
    %c0_39 = arith.constant 0 : index
    %73 = vector.load %arg5[%c3, %c0_38, %c0_39] : memref<9x4x8xbf16, #tpu.memory_space<vmem>>, vector<1x4x8xbf16>
    %74 = vector.shape_cast %73 : vector<1x4x8xbf16> to vector<4x8xbf16>
    %cst_40 = arith.constant dense<0.000000e+00> : vector<32x8xf32>
    %75 = tpu.matmul %72, %74, %cst_40 {dimension_numbers = #tpu.dot_dimension_numbers<[1], [0], [0], [1], [0, 0, 1, 1], [], []>} : vector<32x4xbf16>, vector<4x8xbf16>, vector<32x8xf32> -> vector<32x8xf32>
    %76 = arith.addf %46, %75 : vector<32x8xf32>
    %77 = vector.extract_strided_slice %69 {offsets = [0, 1, 0], sizes = [2, 16, 4], strides = [1, 1, 1]} : vector<2x18x4xf32> to vector<2x16x4xf32>
    %78 = arith.truncf %77 : vector<2x16x4xf32> to vector<2x16x4xbf16>
    %79 = vector.shape_cast %78 : vector<2x16x4xbf16> to vector<32x4xbf16>
    %c4 = arith.constant 4 : index
    %c0_41 = arith.constant 0 : index
    %c0_42 = arith.constant 0 : index
    %80 = vector.load %arg5[%c4, %c0_41, %c0_42] : memref<9x4x8xbf16, #tpu.memory_space<vmem>>, vector<1x4x8xbf16>
    %81 = vector.shape_cast %80 : vector<1x4x8xbf16> to vector<4x8xbf16>
    %cst_43 = arith.constant dense<0.000000e+00> : vector<32x8xf32>
    %82 = tpu.matmul %79, %81, %cst_43 {dimension_numbers = #tpu.dot_dimension_numbers<[1], [0], [0], [1], [0, 0, 1, 1], [], []>} : vector<32x4xbf16>, vector<4x8xbf16>, vector<32x8xf32> -> vector<32x8xf32>
    %83 = arith.addf %76, %82 : vector<32x8xf32>
    %c0_44 = arith.constant 0 : index
    %c0_45 = arith.constant 0 : index
    %84 = vector.load %arg11[%c0_44, %c0_45] : memref<4x8xbf16, #tpu.memory_space<vmem>>, vector<4x8xbf16>
    %cst_46 = arith.constant dense<0.000000e+00> : vector<32x8xf32>
    %85 = tpu.matmul %79, %84, %cst_46 {dimension_numbers = #tpu.dot_dimension_numbers<[1], [0], [0], [1], [0, 0, 1, 1], [], []>} : vector<32x4xbf16>, vector<4x8xbf16>, vector<32x8xf32> -> vector<32x8xf32>
    %c0_47 = arith.constant 0 : index
    %c0_48 = arith.constant 0 : index
    %86 = vector.load %arg10[%c0_47, %c0_48] : memref<1x8xf32, #tpu.memory_space<vmem>>, vector<1x8xf32>
    %87 = vector.broadcast %86 : vector<1x8xf32> to vector<32x8xf32>
    %88 = arith.addf %85, %87 : vector<32x8xf32>
    %c0_49 = arith.constant 0 : index
    %c0_50 = arith.constant 0 : index
    %c0_51 = arith.constant 0 : index
    %89 = vector.load %arg13[%c0_49, %c0_50, %c0_51] : memref<1x32x8xf32, #tpu.memory_space<vmem>>, vector<1x32x8xf32>
    %90 = vector.shape_cast %89 : vector<1x32x8xf32> to vector<32x8xf32>
    %91 = vector.shape_cast %88 : vector<32x8xf32> to vector<1x32x8xf32>
    tpu.vector_store %arg13[%c0_49, %c0_50, %c0_51], %91 {strides = array<i32>} : memref<1x32x8xf32, #tpu.memory_space<vmem>>, vector<1x32x8xf32>,
    %92 = vector.extract_strided_slice %69 {offsets = [0, 2, 0], sizes = [2, 16, 4], strides = [1, 1, 1]} : vector<2x18x4xf32> to vector<2x16x4xf32>
    %93 = arith.truncf %92 : vector<2x16x4xf32> to vector<2x16x4xbf16>
    %94 = vector.shape_cast %93 : vector<2x16x4xbf16> to vector<32x4xbf16>
    %c5 = arith.constant 5 : index
    %c0_52 = arith.constant 0 : index
    %c0_53 = arith.constant 0 : index
    %95 = vector.load %arg5[%c5, %c0_52, %c0_53] : memref<9x4x8xbf16, #tpu.memory_space<vmem>>, vector<1x4x8xbf16>
    %96 = vector.shape_cast %95 : vector<1x4x8xbf16> to vector<4x8xbf16>
    %cst_54 = arith.constant dense<0.000000e+00> : vector<32x8xf32>
    %97 = tpu.matmul %94, %96, %cst_54 {dimension_numbers = #tpu.dot_dimension_numbers<[1], [0], [0], [1], [0, 0, 1, 1], [], []>} : vector<32x4xbf16>, vector<4x8xbf16>, vector<32x8xf32> -> vector<32x8xf32>
    %98 = arith.addf %83, %97 : vector<32x8xf32>
    %c1_i32_55 = arith.constant 1 : i32
    %99 = arith.muli %arg0, %c1_i32_55 : i32
    %c2_i32 = arith.constant 2 : i32
    %100 = arith.addi %99, %c2_i32 : i32
    %c1_i32_56 = arith.constant 1 : i32
    %101 = arith.cmpi sge, %100, %c1_i32_56 : i32
    %c16_i32_57 = arith.constant 16 : i32
    %102 = arith.cmpi sle, %100, %c16_i32_57 : i32
    %103 = arith.andi %101, %102 : i1
    %104 = arith.extui %103 : i1 to i32
    %105 = arith.sitofp %104 : i32 to f32
    %c0_58 = arith.constant 0 : index
    %c0_59 = arith.constant 0 : index
    %c0_60 = arith.constant 0 : index
    %c0_61 = arith.constant 0 : index
    %106 = vector.load %arg4[%c0_58, %c0_59, %c0_60, %c0_61] : memref<1x1x18x4xf32, #tpu.memory_space<vmem>>, vector<1x1x18x4xf32>
    %107 = vector.shape_cast %106 : vector<1x1x18x4xf32> to vector<1x18x4xf32>
    %108 = vector.broadcast %105 : f32 to vector<1x18x4xf32>
    %109 = arith.mulf %107, %108 : vector<1x18x4xf32>
    %c0_62 = arith.constant 0 : index
    %c0_63 = arith.constant 0 : index
    %c0_64 = arith.constant 0 : index
    %c0_65 = arith.constant 0 : index
    %c0_66 = arith.constant 0 : index
    %110 = vector.load %arg3[%c0_62, %c0_63, %c0_64, %c0_65, %c0_66] : memref<1x1x2x18x4xf32, #tpu.memory_space<vmem>>, vector<1x1x2x18x4xf32>
    %111 = vector.shape_cast %110 : vector<1x1x2x18x4xf32> to vector<2x18x4xf32>
    %112 = vector.shape_cast %0 : vector<1x4xf32> to vector<1x1x4xf32>
    %113 = vector.broadcast %112 : vector<1x1x4xf32> to vector<2x18x4xf32>
    %114 = arith.mulf %111, %113 : vector<2x18x4xf32>
    %115 = vector.shape_cast %1 : vector<1x4xf32> to vector<1x1x4xf32>
    %116 = vector.broadcast %115 : vector<1x1x4xf32> to vector<2x18x4xf32>
    %117 = arith.addf %114, %116 : vector<2x18x4xf32>
    %cst_67 = arith.constant 0.000000e+00 : f32
    %118 = vector.broadcast %cst_67 : f32 to vector<2x18x4xf32>
    %119 = arith.maximumf %117, %118 : vector<2x18x4xf32>
    %120 = vector.broadcast %109 : vector<1x18x4xf32> to vector<2x18x4xf32>
    %121 = arith.mulf %119, %120 : vector<2x18x4xf32>
    %122 = vector.extract_strided_slice %121 {offsets = [0, 0, 0], sizes = [2, 16, 4], strides = [1, 1, 1]} : vector<2x18x4xf32> to vector<2x16x4xf32>
    %123 = arith.truncf %122 : vector<2x16x4xf32> to vector<2x16x4xbf16>
    %124 = vector.shape_cast %123 : vector<2x16x4xbf16> to vector<32x4xbf16>
    %c6 = arith.constant 6 : index
    %c0_68 = arith.constant 0 : index
    %c0_69 = arith.constant 0 : index
    %125 = vector.load %arg5[%c6, %c0_68, %c0_69] : memref<9x4x8xbf16, #tpu.memory_space<vmem>>, vector<1x4x8xbf16>
    %126 = vector.shape_cast %125 : vector<1x4x8xbf16> to vector<4x8xbf16>
    %cst_70 = arith.constant dense<0.000000e+00> : vector<32x8xf32>
    %127 = tpu.matmul %124, %126, %cst_70 {dimension_numbers = #tpu.dot_dimension_numbers<[1], [0], [0], [1], [0, 0, 1, 1], [], []>} : vector<32x4xbf16>, vector<4x8xbf16>, vector<32x8xf32> -> vector<32x8xf32>
    %128 = arith.addf %98, %127 : vector<32x8xf32>
    %129 = vector.extract_strided_slice %121 {offsets = [0, 1, 0], sizes = [2, 16, 4], strides = [1, 1, 1]} : vector<2x18x4xf32> to vector<2x16x4xf32>
    %130 = arith.truncf %129 : vector<2x16x4xf32> to vector<2x16x4xbf16>
    %131 = vector.shape_cast %130 : vector<2x16x4xbf16> to vector<32x4xbf16>
    %c7 = arith.constant 7 : index
    %c0_71 = arith.constant 0 : index
    %c0_72 = arith.constant 0 : index
    %132 = vector.load %arg5[%c7, %c0_71, %c0_72] : memref<9x4x8xbf16, #tpu.memory_space<vmem>>, vector<1x4x8xbf16>
    %133 = vector.shape_cast %132 : vector<1x4x8xbf16> to vector<4x8xbf16>
    %cst_73 = arith.constant dense<0.000000e+00> : vector<32x8xf32>
    %134 = tpu.matmul %131, %133, %cst_73 {dimension_numbers = #tpu.dot_dimension_numbers<[1], [0], [0], [1], [0, 0, 1, 1], [], []>} : vector<32x4xbf16>, vector<4x8xbf16>, vector<32x8xf32> -> vector<32x8xf32>
    %135 = arith.addf %128, %134 : vector<32x8xf32>
    %136 = vector.extract_strided_slice %121 {offsets = [0, 2, 0], sizes = [2, 16, 4], strides = [1, 1, 1]} : vector<2x18x4xf32> to vector<2x16x4xf32>
    %137 = arith.truncf %136 : vector<2x16x4xf32> to vector<2x16x4xbf16>
    %138 = vector.shape_cast %137 : vector<2x16x4xbf16> to vector<32x4xbf16>
    %c8 = arith.constant 8 : index
    %c0_74 = arith.constant 0 : index
    %c0_75 = arith.constant 0 : index
    %139 = vector.load %arg5[%c8, %c0_74, %c0_75] : memref<9x4x8xbf16, #tpu.memory_space<vmem>>, vector<1x4x8xbf16>
    %140 = vector.shape_cast %139 : vector<1x4x8xbf16> to vector<4x8xbf16>
    %cst_76 = arith.constant dense<0.000000e+00> : vector<32x8xf32>
    %141 = tpu.matmul %138, %140, %cst_76 {dimension_numbers = #tpu.dot_dimension_numbers<[1], [0], [0], [1], [0, 0, 1, 1], [], []>} : vector<32x4xbf16>, vector<4x8xbf16>, vector<32x8xf32> -> vector<32x8xf32>
    %142 = arith.addf %135, %141 : vector<32x8xf32>
    %c0_77 = arith.constant 0 : index
    %c0_78 = arith.constant 0 : index
    %143 = vector.load %arg8[%c0_77, %c0_78] : memref<1x8xf32, #tpu.memory_space<vmem>>, vector<1x8xf32>
    %144 = vector.broadcast %143 : vector<1x8xf32> to vector<32x8xf32>
    %145 = arith.mulf %142, %144 : vector<32x8xf32>
    %c0_79 = arith.constant 0 : index
    %c0_80 = arith.constant 0 : index
    %146 = vector.load %arg9[%c0_79, %c0_80] : memref<1x8xf32, #tpu.memory_space<vmem>>, vector<1x8xf32>
    %147 = vector.broadcast %146 : vector<1x8xf32> to vector<32x8xf32>
    %148 = arith.addf %145, %147 : vector<32x8xf32>
    %cst_81 = arith.constant 0.000000e+00 : f32
    %149 = vector.broadcast %cst_81 : f32 to vector<32x8xf32>
    %150 = arith.maximumf %148, %149 : vector<32x8xf32>
    %151 = arith.truncf %150 : vector<32x8xf32> to vector<32x8xbf16>
    %c0_82 = arith.constant 0 : index
    %c0_83 = arith.constant 0 : index
    %c0_84 = arith.constant 0 : index
    %152 = vector.load %arg12[%c0_82, %c0_83, %c0_84] : memref<1x32x8xbf16, #tpu.memory_space<vmem>>, vector<1x32x8xbf16>
    %153 = vector.shape_cast %152 : vector<1x32x8xbf16> to vector<32x8xbf16>
    %154 = vector.shape_cast %151 : vector<32x8xbf16> to vector<1x32x8xbf16>
    tpu.vector_store %arg12[%c0_82, %c0_83, %c0_84], %154 {strides = array<i32>} : memref<1x32x8xbf16, #tpu.memory_space<vmem>>, vector<1x32x8xbf16>,
    return
  }
  func.func @transform_0(%arg0: i32) -> (i32, i32, i32, i32, i32) {
    %c1_i32 = arith.constant 1 : i32
    %0 = arith.muli %arg0, %c1_i32 : i32
    %c0_i32 = arith.constant 0 : i32
    %1 = arith.addi %0, %c0_i32 : i32
    %c0_i32_0 = arith.constant 0 : i32
    %c0_i32_1 = arith.constant 0 : i32
    %c0_i32_2 = arith.constant 0 : i32
    %c0_i32_3 = arith.constant 0 : i32
    %c0_i32_4 = arith.constant 0 : i32
    return %c0_i32_0, %1, %c0_i32_1, %c0_i32_2, %c0_i32_3 : i32, i32, i32, i32, i32
  }
  func.func @transform_1(%arg0: i32) -> (i32, i32, i32, i32, i32) {
    %c1_i32 = arith.constant 1 : i32
    %0 = arith.muli %arg0, %c1_i32 : i32
    %c1_i32_0 = arith.constant 1 : i32
    %1 = arith.addi %0, %c1_i32_0 : i32
    %c0_i32 = arith.constant 0 : i32
    %c0_i32_1 = arith.constant 0 : i32
    %c0_i32_2 = arith.constant 0 : i32
    %c0_i32_3 = arith.constant 0 : i32
    %c0_i32_4 = arith.constant 0 : i32
    return %c0_i32, %1, %c0_i32_1, %c0_i32_2, %c0_i32_3 : i32, i32, i32, i32, i32
  }
  func.func @transform_2(%arg0: i32) -> (i32, i32, i32, i32, i32) {
    %c1_i32 = arith.constant 1 : i32
    %0 = arith.muli %arg0, %c1_i32 : i32
    %c2_i32 = arith.constant 2 : i32
    %1 = arith.addi %0, %c2_i32 : i32
    %c0_i32 = arith.constant 0 : i32
    %c0_i32_0 = arith.constant 0 : i32
    %c0_i32_1 = arith.constant 0 : i32
    %c0_i32_2 = arith.constant 0 : i32
    %c0_i32_3 = arith.constant 0 : i32
    return %c0_i32, %1, %c0_i32_0, %c0_i32_1, %c0_i32_2 : i32, i32, i32, i32, i32
  }
  func.func @transform_3(%arg0: i32) -> (i32, i32, i32, i32) {
    %c0_i32 = arith.constant 0 : i32
    %c0_i32_0 = arith.constant 0 : i32
    %c0_i32_1 = arith.constant 0 : i32
    %c0_i32_2 = arith.constant 0 : i32
    %c0_i32_3 = arith.constant 0 : i32
    return %c0_i32, %c0_i32_0, %c0_i32_1, %c0_i32_2 : i32, i32, i32, i32
  }
  func.func @transform_4(%arg0: i32) -> (i32, i32, i32) {
    %c0_i32 = arith.constant 0 : i32
    %c0_i32_0 = arith.constant 0 : i32
    %c0_i32_1 = arith.constant 0 : i32
    %c0_i32_2 = arith.constant 0 : i32
    return %c0_i32, %c0_i32_0, %c0_i32_1 : i32, i32, i32
  }
  func.func @transform_5(%arg0: i32) -> (i32, i32) {
    %c0_i32 = arith.constant 0 : i32
    %c0_i32_0 = arith.constant 0 : i32
    %c0_i32_1 = arith.constant 0 : i32
    return %c0_i32, %c0_i32_0 : i32, i32
  }
  func.func @transform_6(%arg0: i32) -> (i32, i32) {
    %c0_i32 = arith.constant 0 : i32
    %c0_i32_0 = arith.constant 0 : i32
    %c0_i32_1 = arith.constant 0 : i32
    return %c0_i32, %c0_i32_0 : i32, i32
  }
  func.func @transform_7(%arg0: i32) -> (i32, i32) {
    %c0_i32 = arith.constant 0 : i32
    %c0_i32_0 = arith.constant 0 : i32
    %c0_i32_1 = arith.constant 0 : i32
    return %c0_i32, %c0_i32_0 : i32, i32
  }
  func.func @transform_8(%arg0: i32) -> (i32, i32) {
    %c0_i32 = arith.constant 0 : i32
    %c0_i32_0 = arith.constant 0 : i32
    %c0_i32_1 = arith.constant 0 : i32
    return %c0_i32, %c0_i32_0 : i32, i32
  }
  func.func @transform_9(%arg0: i32) -> (i32, i32) {
    %c0_i32 = arith.constant 0 : i32
    %c0_i32_0 = arith.constant 0 : i32
    %c0_i32_1 = arith.constant 0 : i32
    return %c0_i32, %c0_i32_0 : i32, i32
  }
  func.func @transform_10(%arg0: i32) -> (i32, i32) {
    %c0_i32 = arith.constant 0 : i32
    %c0_i32_0 = arith.constant 0 : i32
    %c0_i32_1 = arith.constant 0 : i32
    return %c0_i32, %c0_i32_0 : i32, i32
  }
  func.func @transform_11(%arg0: i32) -> (i32, i32, i32) {
    %c0_i32 = arith.constant 0 : i32
    %c0_i32_0 = arith.constant 0 : i32
    %c0_i32_1 = arith.constant 0 : i32
    return %arg0, %c0_i32, %c0_i32_0 : i32, i32, i32
  }
  func.func @transform_12(%arg0: i32) -> (i32, i32, i32) {
    %c0_i32 = arith.constant 0 : i32
    %c0_i32_0 = arith.constant 0 : i32
    %c0_i32_1 = arith.constant 0 : i32
    return %arg0, %c0_i32, %c0_i32_0 : i32, i32, i32
  }
}

module attributes {stable_mosaic.version = 11 : i64} {
  func.func @kernel(%arg0: i32, %arg1: memref<1x2x18x8xbf16, #tpu.memory_space<vmem>>, %arg2: memref<1x2x18x8xbf16, #tpu.memory_space<vmem>>, %arg3: memref<1x2x18x8xbf16, #tpu.memory_space<vmem>>, %arg4: memref<9x8x8xbf16, #tpu.memory_space<vmem>>, %arg5: memref<1x32x8xf32, #tpu.memory_space<vmem>>, %arg6: memref<1x32x8xf32, #tpu.memory_space<vmem>>) attributes {dimension_semantics = [#tpu.dimension_semantics<parallel>], iteration_bounds = array<i64: 16>, scalar_prefetch = 0 : i64, scratch_operands = 0 : i64, tpu.core_type = #tpu.core_type<tc>, window_params = [{transform_indices = @transform_0, window_bounds = array<i64: 1, 2, 18, 8>}, {transform_indices = @transform_1, window_bounds = array<i64: 1, 2, 18, 8>}, {transform_indices = @transform_2, window_bounds = array<i64: 1, 2, 18, 8>}, {pipeline_mode = #tpu.pipeline_mode<synchronous>, transform_indices = @transform_3, window_bounds = array<i64: 9, 8, 8>}, {transform_indices = @transform_4, window_bounds = array<i64: 1, 32, 8>}, {transform_indices = @transform_5, window_bounds = array<i64: 1, 32, 8>}]} {
    %c0 = arith.constant 0 : index
    %c0_0 = arith.constant 0 : index
    %c0_1 = arith.constant 0 : index
    %0 = vector.load %arg5[%c0, %c0_0, %c0_1] : memref<1x32x8xf32, #tpu.memory_space<vmem>>, vector<1x32x8xf32>
    %1 = vector.shape_cast %0 : vector<1x32x8xf32> to vector<32x8xf32>
    %c0_2 = arith.constant 0 : index
    %c0_3 = arith.constant 0 : index
    %c0_4 = arith.constant 0 : index
    %c0_5 = arith.constant 0 : index
    %2 = vector.load %arg1[%c0_2, %c0_3, %c0_4, %c0_5] : memref<1x2x18x8xbf16, #tpu.memory_space<vmem>>, vector<1x2x18x8xbf16>
    %3 = vector.shape_cast %2 : vector<1x2x18x8xbf16> to vector<2x18x8xbf16>
    %4 = vector.extract_strided_slice %3 {offsets = [0, 0, 0], sizes = [2, 16, 8], strides = [1, 1, 1]} : vector<2x18x8xbf16> to vector<2x16x8xbf16>
    %5 = vector.shape_cast %4 : vector<2x16x8xbf16> to vector<32x8xbf16>
    %c0_6 = arith.constant 0 : index
    %c0_7 = arith.constant 0 : index
    %c0_8 = arith.constant 0 : index
    %6 = vector.load %arg4[%c0_6, %c0_7, %c0_8] : memref<9x8x8xbf16, #tpu.memory_space<vmem>>, vector<1x8x8xbf16>
    %7 = vector.shape_cast %6 : vector<1x8x8xbf16> to vector<8x8xbf16>
    %cst = arith.constant dense<0.000000e+00> : vector<32x8xf32>
    %8 = tpu.matmul %5, %7, %cst {dimension_numbers = #tpu.dot_dimension_numbers<[1], [0], [0], [1], [0, 0, 1, 1], [], []>} : vector<32x8xbf16>, vector<8x8xbf16>, vector<32x8xf32> -> vector<32x8xf32>
    %9 = arith.addf %1, %8 : vector<32x8xf32>
    %10 = vector.extract_strided_slice %3 {offsets = [0, 1, 0], sizes = [2, 16, 8], strides = [1, 1, 1]} : vector<2x18x8xbf16> to vector<2x16x8xbf16>
    %11 = vector.shape_cast %10 : vector<2x16x8xbf16> to vector<32x8xbf16>
    %c1 = arith.constant 1 : index
    %c0_9 = arith.constant 0 : index
    %c0_10 = arith.constant 0 : index
    %12 = vector.load %arg4[%c1, %c0_9, %c0_10] : memref<9x8x8xbf16, #tpu.memory_space<vmem>>, vector<1x8x8xbf16>
    %13 = vector.shape_cast %12 : vector<1x8x8xbf16> to vector<8x8xbf16>
    %cst_11 = arith.constant dense<0.000000e+00> : vector<32x8xf32>
    %14 = tpu.matmul %11, %13, %cst_11 {dimension_numbers = #tpu.dot_dimension_numbers<[1], [0], [0], [1], [0, 0, 1, 1], [], []>} : vector<32x8xbf16>, vector<8x8xbf16>, vector<32x8xf32> -> vector<32x8xf32>
    %15 = arith.addf %9, %14 : vector<32x8xf32>
    %16 = vector.extract_strided_slice %3 {offsets = [0, 2, 0], sizes = [2, 16, 8], strides = [1, 1, 1]} : vector<2x18x8xbf16> to vector<2x16x8xbf16>
    %17 = vector.shape_cast %16 : vector<2x16x8xbf16> to vector<32x8xbf16>
    %c2 = arith.constant 2 : index
    %c0_12 = arith.constant 0 : index
    %c0_13 = arith.constant 0 : index
    %18 = vector.load %arg4[%c2, %c0_12, %c0_13] : memref<9x8x8xbf16, #tpu.memory_space<vmem>>, vector<1x8x8xbf16>
    %19 = vector.shape_cast %18 : vector<1x8x8xbf16> to vector<8x8xbf16>
    %cst_14 = arith.constant dense<0.000000e+00> : vector<32x8xf32>
    %20 = tpu.matmul %17, %19, %cst_14 {dimension_numbers = #tpu.dot_dimension_numbers<[1], [0], [0], [1], [0, 0, 1, 1], [], []>} : vector<32x8xbf16>, vector<8x8xbf16>, vector<32x8xf32> -> vector<32x8xf32>
    %21 = arith.addf %15, %20 : vector<32x8xf32>
    %c0_15 = arith.constant 0 : index
    %c0_16 = arith.constant 0 : index
    %c0_17 = arith.constant 0 : index
    %c0_18 = arith.constant 0 : index
    %22 = vector.load %arg2[%c0_15, %c0_16, %c0_17, %c0_18] : memref<1x2x18x8xbf16, #tpu.memory_space<vmem>>, vector<1x2x18x8xbf16>
    %23 = vector.shape_cast %22 : vector<1x2x18x8xbf16> to vector<2x18x8xbf16>
    %24 = vector.extract_strided_slice %23 {offsets = [0, 0, 0], sizes = [2, 16, 8], strides = [1, 1, 1]} : vector<2x18x8xbf16> to vector<2x16x8xbf16>
    %25 = vector.shape_cast %24 : vector<2x16x8xbf16> to vector<32x8xbf16>
    %c3 = arith.constant 3 : index
    %c0_19 = arith.constant 0 : index
    %c0_20 = arith.constant 0 : index
    %26 = vector.load %arg4[%c3, %c0_19, %c0_20] : memref<9x8x8xbf16, #tpu.memory_space<vmem>>, vector<1x8x8xbf16>
    %27 = vector.shape_cast %26 : vector<1x8x8xbf16> to vector<8x8xbf16>
    %cst_21 = arith.constant dense<0.000000e+00> : vector<32x8xf32>
    %28 = tpu.matmul %25, %27, %cst_21 {dimension_numbers = #tpu.dot_dimension_numbers<[1], [0], [0], [1], [0, 0, 1, 1], [], []>} : vector<32x8xbf16>, vector<8x8xbf16>, vector<32x8xf32> -> vector<32x8xf32>
    %29 = arith.addf %21, %28 : vector<32x8xf32>
    %30 = vector.extract_strided_slice %23 {offsets = [0, 1, 0], sizes = [2, 16, 8], strides = [1, 1, 1]} : vector<2x18x8xbf16> to vector<2x16x8xbf16>
    %31 = vector.shape_cast %30 : vector<2x16x8xbf16> to vector<32x8xbf16>
    %c4 = arith.constant 4 : index
    %c0_22 = arith.constant 0 : index
    %c0_23 = arith.constant 0 : index
    %32 = vector.load %arg4[%c4, %c0_22, %c0_23] : memref<9x8x8xbf16, #tpu.memory_space<vmem>>, vector<1x8x8xbf16>
    %33 = vector.shape_cast %32 : vector<1x8x8xbf16> to vector<8x8xbf16>
    %cst_24 = arith.constant dense<0.000000e+00> : vector<32x8xf32>
    %34 = tpu.matmul %31, %33, %cst_24 {dimension_numbers = #tpu.dot_dimension_numbers<[1], [0], [0], [1], [0, 0, 1, 1], [], []>} : vector<32x8xbf16>, vector<8x8xbf16>, vector<32x8xf32> -> vector<32x8xf32>
    %35 = arith.addf %29, %34 : vector<32x8xf32>
    %36 = vector.extract_strided_slice %23 {offsets = [0, 2, 0], sizes = [2, 16, 8], strides = [1, 1, 1]} : vector<2x18x8xbf16> to vector<2x16x8xbf16>
    %37 = vector.shape_cast %36 : vector<2x16x8xbf16> to vector<32x8xbf16>
    %c5 = arith.constant 5 : index
    %c0_25 = arith.constant 0 : index
    %c0_26 = arith.constant 0 : index
    %38 = vector.load %arg4[%c5, %c0_25, %c0_26] : memref<9x8x8xbf16, #tpu.memory_space<vmem>>, vector<1x8x8xbf16>
    %39 = vector.shape_cast %38 : vector<1x8x8xbf16> to vector<8x8xbf16>
    %cst_27 = arith.constant dense<0.000000e+00> : vector<32x8xf32>
    %40 = tpu.matmul %37, %39, %cst_27 {dimension_numbers = #tpu.dot_dimension_numbers<[1], [0], [0], [1], [0, 0, 1, 1], [], []>} : vector<32x8xbf16>, vector<8x8xbf16>, vector<32x8xf32> -> vector<32x8xf32>
    %41 = arith.addf %35, %40 : vector<32x8xf32>
    %c0_28 = arith.constant 0 : index
    %c0_29 = arith.constant 0 : index
    %c0_30 = arith.constant 0 : index
    %c0_31 = arith.constant 0 : index
    %42 = vector.load %arg3[%c0_28, %c0_29, %c0_30, %c0_31] : memref<1x2x18x8xbf16, #tpu.memory_space<vmem>>, vector<1x2x18x8xbf16>
    %43 = vector.shape_cast %42 : vector<1x2x18x8xbf16> to vector<2x18x8xbf16>
    %44 = vector.extract_strided_slice %43 {offsets = [0, 0, 0], sizes = [2, 16, 8], strides = [1, 1, 1]} : vector<2x18x8xbf16> to vector<2x16x8xbf16>
    %45 = vector.shape_cast %44 : vector<2x16x8xbf16> to vector<32x8xbf16>
    %c6 = arith.constant 6 : index
    %c0_32 = arith.constant 0 : index
    %c0_33 = arith.constant 0 : index
    %46 = vector.load %arg4[%c6, %c0_32, %c0_33] : memref<9x8x8xbf16, #tpu.memory_space<vmem>>, vector<1x8x8xbf16>
    %47 = vector.shape_cast %46 : vector<1x8x8xbf16> to vector<8x8xbf16>
    %cst_34 = arith.constant dense<0.000000e+00> : vector<32x8xf32>
    %48 = tpu.matmul %45, %47, %cst_34 {dimension_numbers = #tpu.dot_dimension_numbers<[1], [0], [0], [1], [0, 0, 1, 1], [], []>} : vector<32x8xbf16>, vector<8x8xbf16>, vector<32x8xf32> -> vector<32x8xf32>
    %49 = arith.addf %41, %48 : vector<32x8xf32>
    %50 = vector.extract_strided_slice %43 {offsets = [0, 1, 0], sizes = [2, 16, 8], strides = [1, 1, 1]} : vector<2x18x8xbf16> to vector<2x16x8xbf16>
    %51 = vector.shape_cast %50 : vector<2x16x8xbf16> to vector<32x8xbf16>
    %c7 = arith.constant 7 : index
    %c0_35 = arith.constant 0 : index
    %c0_36 = arith.constant 0 : index
    %52 = vector.load %arg4[%c7, %c0_35, %c0_36] : memref<9x8x8xbf16, #tpu.memory_space<vmem>>, vector<1x8x8xbf16>
    %53 = vector.shape_cast %52 : vector<1x8x8xbf16> to vector<8x8xbf16>
    %cst_37 = arith.constant dense<0.000000e+00> : vector<32x8xf32>
    %54 = tpu.matmul %51, %53, %cst_37 {dimension_numbers = #tpu.dot_dimension_numbers<[1], [0], [0], [1], [0, 0, 1, 1], [], []>} : vector<32x8xbf16>, vector<8x8xbf16>, vector<32x8xf32> -> vector<32x8xf32>
    %55 = arith.addf %49, %54 : vector<32x8xf32>
    %56 = vector.extract_strided_slice %43 {offsets = [0, 2, 0], sizes = [2, 16, 8], strides = [1, 1, 1]} : vector<2x18x8xbf16> to vector<2x16x8xbf16>
    %57 = vector.shape_cast %56 : vector<2x16x8xbf16> to vector<32x8xbf16>
    %c8 = arith.constant 8 : index
    %c0_38 = arith.constant 0 : index
    %c0_39 = arith.constant 0 : index
    %58 = vector.load %arg4[%c8, %c0_38, %c0_39] : memref<9x8x8xbf16, #tpu.memory_space<vmem>>, vector<1x8x8xbf16>
    %59 = vector.shape_cast %58 : vector<1x8x8xbf16> to vector<8x8xbf16>
    %cst_40 = arith.constant dense<0.000000e+00> : vector<32x8xf32>
    %60 = tpu.matmul %57, %59, %cst_40 {dimension_numbers = #tpu.dot_dimension_numbers<[1], [0], [0], [1], [0, 0, 1, 1], [], []>} : vector<32x8xbf16>, vector<8x8xbf16>, vector<32x8xf32> -> vector<32x8xf32>
    %61 = arith.addf %55, %60 : vector<32x8xf32>
    %c0_41 = arith.constant 0 : index
    %c0_42 = arith.constant 0 : index
    %c0_43 = arith.constant 0 : index
    %62 = vector.load %arg6[%c0_41, %c0_42, %c0_43] : memref<1x32x8xf32, #tpu.memory_space<vmem>>, vector<1x32x8xf32>
    %63 = vector.shape_cast %62 : vector<1x32x8xf32> to vector<32x8xf32>
    %64 = vector.shape_cast %61 : vector<32x8xf32> to vector<1x32x8xf32>
    tpu.vector_store %arg6[%c0_41, %c0_42, %c0_43], %64 {strides = array<i32>} : memref<1x32x8xf32, #tpu.memory_space<vmem>>, vector<1x32x8xf32>,
    return
  }
  func.func @transform_0(%arg0: i32) -> (i32, i32, i32, i32) {
    %c0_i32 = arith.constant 0 : i32
    %0 = arith.addi %arg0, %c0_i32 : i32
    %c0_i32_0 = arith.constant 0 : i32
    %c0_i32_1 = arith.constant 0 : i32
    %c0_i32_2 = arith.constant 0 : i32
    %c0_i32_3 = arith.constant 0 : i32
    return %0, %c0_i32_0, %c0_i32_1, %c0_i32_2 : i32, i32, i32, i32
  }
  func.func @transform_1(%arg0: i32) -> (i32, i32, i32, i32) {
    %c1_i32 = arith.constant 1 : i32
    %0 = arith.addi %arg0, %c1_i32 : i32
    %c0_i32 = arith.constant 0 : i32
    %c0_i32_0 = arith.constant 0 : i32
    %c0_i32_1 = arith.constant 0 : i32
    %c0_i32_2 = arith.constant 0 : i32
    return %0, %c0_i32, %c0_i32_0, %c0_i32_1 : i32, i32, i32, i32
  }
  func.func @transform_2(%arg0: i32) -> (i32, i32, i32, i32) {
    %c2_i32 = arith.constant 2 : i32
    %0 = arith.addi %arg0, %c2_i32 : i32
    %c0_i32 = arith.constant 0 : i32
    %c0_i32_0 = arith.constant 0 : i32
    %c0_i32_1 = arith.constant 0 : i32
    %c0_i32_2 = arith.constant 0 : i32
    return %0, %c0_i32, %c0_i32_0, %c0_i32_1 : i32, i32, i32, i32
  }
  func.func @transform_3(%arg0: i32) -> (i32, i32, i32) {
    %c0_i32 = arith.constant 0 : i32
    %c0_i32_0 = arith.constant 0 : i32
    %c0_i32_1 = arith.constant 0 : i32
    %c0_i32_2 = arith.constant 0 : i32
    return %c0_i32, %c0_i32_0, %c0_i32_1 : i32, i32, i32
  }
  func.func @transform_4(%arg0: i32) -> (i32, i32, i32) {
    %c0_i32 = arith.constant 0 : i32
    %c0_i32_0 = arith.constant 0 : i32
    %c0_i32_1 = arith.constant 0 : i32
    return %arg0, %c0_i32, %c0_i32_0 : i32, i32, i32
  }
  func.func @transform_5(%arg0: i32) -> (i32, i32, i32) {
    %c0_i32 = arith.constant 0 : i32
    %c0_i32_0 = arith.constant 0 : i32
    %c0_i32_1 = arith.constant 0 : i32
    return %arg0, %c0_i32, %c0_i32_0 : i32, i32, i32
  }
}

</mosaic_0001>

<llo_original>
// kernel: preact_block_forward.2
$region0: #{preact_block_forward.2}
  #allocation0 [shape = 'u32[]', space=smem, size = 0x4, offset = 0x4, fixed_abs, tag = 'smem constant byte address 0x4 - core index']
  #allocation1 [shape = 'u32[72,128]{1,0:T(1,128)}', space=vmem, size = 0x9000, scoped, tag = 'internal scratch']
  %s0 = inlined_call_operand.vmem [shape: f32[1,18,2,18,4], index: 0, kind: input, shape index: {}, may-alias: {0,1,2}]
  %s1 = inlined_call_operand.vmem [shape: f32[1,18,2,18,4], index: 1, kind: input, shape index: {}, may-alias: {0,1,2}]
  %s2 = inlined_call_operand.vmem [shape: f32[1,18,2,18,4], index: 2, kind: input, shape index: {}, may-alias: {0,1,2}]
  %s3 = inlined_call_operand.vmem [shape: f32[1,1,18,4], index: 3, kind: input, shape index: {}]
  %s4 = inlined_call_operand.vmem [shape: bf16[9,4,8], index: 4, kind: input, shape index: {}]
  %s5 = inlined_call_operand.vmem [shape: f32[1,4], index: 5, kind: input, shape index: {}]
  %s6 = inlined_call_operand.vmem [shape: f32[1,4], index: 6, kind: input, shape index: {}]
  %s7 = inlined_call_operand.vmem [shape: f32[1,8], index: 7, kind: input, shape index: {}]
  %s8 = inlined_call_operand.vmem [shape: f32[1,8], index: 8, kind: input, shape index: {}]
  %s9 = inlined_call_operand.vmem [shape: f32[1,8], index: 9, kind: input, shape index: {}]
  %s10 = inlined_call_operand.vmem [shape: bf16[4,8], index: 10, kind: input, shape index: {}]
  %s11 = inlined_call_operand.vmem [shape: bf16[16,32,8], index: 11, kind: output, shape index: {0}]
  %s12 = inlined_call_operand.vmem [shape: f32[16,32,8], index: 12, kind: output, shape index: {1}]
  %13 = xla_tuple %s11, %s12
  %s14 = sld [smem:[#allocation0]]
  $region85: #{preact_block_forward.2} parent=0
    _
  %s16 = ssub.s32 1, %s14
  %s17 = scalar_select 0, %s16, %s14
  loop: start=0, step=1, limit=18
  $region2: #{preact_block_forward.2} parent=0 // loop_pre_header
    _
  $region3: #{preact_block_forward.2} parent=0 // loop_header
    %s19 = sphi 0, %s23
    %p20 = scmp.ge.s32.totalorder %s19, 18
    %s29 = sphi 0, %s31
    %s32 = sphi 0, %s29
    %s33 = sphi 0, %s32
    %s49 = sphi 0, %s33
    %s57 = sphi 0, %s59
    %s60 = sphi 0, %s57
    %s61 = sphi 0, %s60
    %s77 = sphi 0, %s61
    %s85 = sphi 0, %s87
    %s88 = sphi 0, %s85
    %s89 = sphi 0, %s88
    %s105 = sphi 0, %s89
    %s109 = sphi 0, %s109
    %s111 = sphi 0, %s109
    %s112 = sphi 0, %s111
    %s126 = sphi 0, %s112
    %s130 = sphi 0, %s130
    %s132 = sphi 0, %s130
    %s133 = sphi 0, %s132
    %s147 = sphi 0, %s133
    %s151 = sphi 0, %s151
    %s153 = sphi 0, %s151
    %s154 = sphi 0, %s153
    %s168 = sphi 0, %s154
    %s172 = sphi 0, %s172
    %s174 = sphi 0, %s172
    %s175 = sphi 0, %s174
    %s189 = sphi 0, %s175
    %s193 = sphi 0, %s193
    %s195 = sphi 0, %s193
    %s196 = sphi 0, %s195
    %s210 = sphi 0, %s196
    %s214 = sphi 0, %s214
    %s216 = sphi 0, %s214
    %s217 = sphi 0, %s216
    %s231 = sphi 0, %s217
    %s235 = sphi 0, %s235
    %s237 = sphi 0, %s235
    %s238 = sphi 0, %s237
    %s252 = sphi 0, %s238
    %s256 = sphi 0, %s256
    %s258 = sphi 0, %s256
    %s259 = sphi 0, %s258
    %s273 = sphi 0, %s259
    %s279 = sphi 0, %s281
    %s282 = sphi 0, %s279
    %s283 = sphi 0, %s282
    %s299 = sphi 0, %s283
    %s305 = sphi 0, %s307
    %s308 = sphi 0, %s305
    %s309 = sphi 0, %s308
    %s325 = sphi 0, %s309
  $region4: #{preact_block_forward.2} parent=0 // loop_header_branch
    %22 = sbr.rel (%p20) target = $region8
  $region5: #{preact_block_forward.2} parent=0 // loop_body
    %s24 = ssub.s32 %s19, 1
    %s25 = ssub.s32 %s19, 2
    %s26 = sadd.s32 %s19, 1
    %s27 = ssub.s32 %s19, %s26
    %p28 = scmp.eq.s32.totalorder %s27, 0
    %s30 = sadd.s32 %s29, 1
    %s31 = scalar_select %p28, %s29, %s30
    %p34 = pneg %p28
    %p35 = scmp.eq.s32.totalorder %s19, 15
    %p36 = por %p34, %p35
    %p37 = scmp.ne.s32.totalorder %s29, %s32
    %p38 = scmp.eq.s32.totalorder %s19, 0
    %p39 = por %p37, %p38
    %p40 = scmp.ne.s32.totalorder %s29, %s32
    %p41 = scmp.eq.s32.totalorder %s24, 15
    %p42 = por %p40, %p41
    %p43 = scmp.ne.s32.totalorder %s32, %s33
    %p44 = scmp.eq.s32.totalorder %s24, 0
    %p45 = por %p43, %p44
    %p46 = scmp.ne.s32.totalorder %s32, %s33
    %p47 = scmp.eq.s32.totalorder %s25, 15
    %p48 = por %p46, %p47
    %p50 = scmp.ne.s32.totalorder %s33, %s49
    %p51 = scmp.eq.s32.totalorder %s25, 0
    %p52 = por %p50, %p51
    %s53 = sadd.s32 %s19, 1
    %s54 = sadd.s32 %s26, 1
    %s55 = ssub.s32 %s53, %s54
    %p56 = scmp.eq.s32.totalorder %s55, 0
    %s58 = sadd.s32 %s57, 1
    %s59 = scalar_select %p56, %s57, %s58
    %p62 = pneg %p56
    %p63 = scmp.eq.s32.totalorder %s19, 15
    %p64 = por %p62, %p63
    %p65 = scmp.ne.s32.totalorder %s57, %s60
    %p66 = scmp.eq.s32.totalorder %s19, 0
    %p67 = por %p65, %p66
    %p68 = scmp.ne.s32.totalorder %s57, %s60
    %p69 = scmp.eq.s32.totalorder %s24, 15
    %p70 = por %p68, %p69
    %p71 = scmp.ne.s32.totalorder %s60, %s61
    %p72 = scmp.eq.s32.totalorder %s24, 0
    %p73 = por %p71, %p72
    %p74 = scmp.ne.s32.totalorder %s60, %s61
    %p75 = scmp.eq.s32.totalorder %s25, 15
    %p76 = por %p74, %p75
    %p78 = scmp.ne.s32.totalorder %s61, %s77
    %p79 = scmp.eq.s32.totalorder %s25, 0
    %p80 = por %p78, %p79
    %s81 = sadd.s32 %s19, 2
    %s82 = sadd.s32 %s26, 2
    %s83 = ssub.s32 %s81, %s82
    %p84 = scmp.eq.s32.totalorder %s83, 0
    %s86 = sadd.s32 %s85, 1
    %s87 = scalar_select %p84, %s85, %s86
    %p90 = pneg %p84
    %p91 = scmp.eq.s32.totalorder %s19, 15
    %p92 = por %p90, %p91
    %p93 = scmp.ne.s32.totalorder %s85, %s88
    %p94 = scmp.eq.s32.totalorder %s19, 0
    %p95 = por %p93, %p94
    %p96 = scmp.ne.s32.totalorder %s85, %s88
    %p97 = scmp.eq.s32.totalorder %s24, 15
    %p98 = por %p96, %p97
    %p99 = scmp.ne.s32.totalorder %s88, %s89
    %p100 = scmp.eq.s32.totalorder %s24, 0
    %p101 = por %p99, %p100
    %p102 = scmp.ne.s32.totalorder %s88, %s89
    %p103 = scmp.eq.s32.totalorder %s25, 15
    %p104 = por %p102, %p103
    %p106 = scmp.ne.s32.totalorder %s89, %s105
    %p107 = scmp.eq.s32.totalorder %s25, 0
    %p108 = por %p106, %p107
    %s110 = sadd.s32 %s109, 1
    %p113 = scmp.eq.s32.totalorder %s19, 15
    %p114 = scmp.ne.s32.totalorder %s109, %s111
    %p115 = scmp.eq.s32.totalorder %s19, 0
    %p116 = por %p114, %p115
    %p117 = scmp.ne.s32.totalorder %s109, %s111
    %p118 = scmp.eq.s32.totalorder %s24, 15
    %p119 = por %p117, %p118
    %p120 = scmp.ne.s32.totalorder %s111, %s112
    %p121 = scmp.eq.s32.totalorder %s24, 0
    %p122 = por %p120, %p121
    %p123 = scmp.ne.s32.totalorder %s111, %s112
    %p124 = scmp.eq.s32.totalorder %s25, 15
    %p125 = por %p123, %p124
    %p127 = scmp.ne.s32.totalorder %s112, %s126
    %p128 = scmp.eq.s32.totalorder %s25, 0
    %p129 = por %p127, %p128
    %s131 = sadd.s32 %s130, 1
    %p134 = scmp.eq.s32.totalorder %s19, 15
    %p135 = scmp.ne.s32.totalorder %s130, %s132
    %p136 = scmp.eq.s32.totalorder %s19, 0
    %p137 = por %p135, %p136
    %p138 = scmp.ne.s32.totalorder %s130, %s132
    %p139 = scmp.eq.s32.totalorder %s24, 15
    %p140 = por %p138, %p139
    %p141 = scmp.ne.s32.totalorder %s132, %s133
    %p142 = scmp.eq.s32.totalorder %s24, 0
    %p143 = por %p141, %p142
    %p144 = scmp.ne.s32.totalorder %s132, %s133
    %p145 = scmp.eq.s32.totalorder %s25, 15
    %p146 = por %p144, %p145
    %p148 = scmp.ne.s32.totalorder %s133, %s147
    %p149 = scmp.eq.s32.totalorder %s25, 0
    %p150 = por %p148, %p149
    %s152 = sadd.s32 %s151, 1
    %p155 = scmp.eq.s32.totalorder %s19, 15
    %p156 = scmp.ne.s32.totalorder %s151, %s153
    %p157 = scmp.eq.s32.totalorder %s19, 0
    %p158 = por %p156, %p157
    %p159 = scmp.ne.s32.totalorder %s151, %s153
    %p160 = scmp.eq.s32.totalorder %s24, 15
    %p161 = por %p159, %p160
    %p162 = scmp.ne.s32.totalorder %s153, %s154
    %p163 = scmp.eq.s32.totalorder %s24, 0
    %p164 = por %p162, %p163
    %p165 = scmp.ne.s32.totalorder %s153, %s154
    %p166 = scmp.eq.s32.totalorder %s25, 15
    %p167 = por %p165, %p166
    %p169 = scmp.ne.s32.totalorder %s154, %s168
    %p170 = scmp.eq.s32.totalorder %s25, 0
    %p171 = por %p169, %p170
    %s173 = sadd.s32 %s172, 1
    %p176 = scmp.eq.s32.totalorder %s19, 15
    %p177 = scmp.ne.s32.totalorder %s172, %s174
    %p178 = scmp.eq.s32.totalorder %s19, 0
    %p179 = por %p177, %p178
    %p180 = scmp.ne.s32.totalorder %s172, %s174
    %p181 = scmp.eq.s32.totalorder %s24, 15
    %p182 = por %p180, %p181
    %p183 = scmp.ne.s32.totalorder %s174, %s175
    %p184 = scmp.eq.s32.totalorder %s24, 0
    %p185 = por %p183, %p184
    %p186 = scmp.ne.s32.totalorder %s174, %s175
    %p187 = scmp.eq.s32.totalorder %s25, 15
    %p188 = por %p186, %p187
    %p190 = scmp.ne.s32.totalorder %s175, %s189
    %p191 = scmp.eq.s32.totalorder %s25, 0
    %p192 = por %p190, %p191
    %s194 = sadd.s32 %s193, 1
    %p197 = scmp.eq.s32.totalorder %s19, 15
    %p198 = scmp.ne.s32.totalorder %s193, %s195
    %p199 = scmp.eq.s32.totalorder %s19, 0
    %p200 = por %p198, %p199
    %p201 = scmp.ne.s32.totalorder %s193, %s195
    %p202 = scmp.eq.s32.totalorder %s24, 15
    %p203 = por %p201, %p202
    %p204 = scmp.ne.s32.totalorder %s195, %s196
    %p205 = scmp.eq.s32.totalorder %s24, 0
    %p206 = por %p204, %p205
    %p207 = scmp.ne.s32.totalorder %s195, %s196
    %p208 = scmp.eq.s32.totalorder %s25, 15
    %p209 = por %p207, %p208
    %p211 = scmp.ne.s32.totalorder %s196, %s210
    %p212 = scmp.eq.s32.totalorder %s25, 0
    %p213 = por %p211, %p212
    %s215 = sadd.s32 %s214, 1
    %p218 = scmp.eq.s32.totalorder %s19, 15
    %p219 = scmp.ne.s32.totalorder %s214, %s216
    %p220 = scmp.eq.s32.totalorder %s19, 0
    %p221 = por %p219, %p220
    %p222 = scmp.ne.s32.totalorder %s214, %s216
    %p223 = scmp.eq.s32.totalorder %s24, 15
    %p224 = por %p222, %p223
    %p225 = scmp.ne.s32.totalorder %s216, %s217
    %p226 = scmp.eq.s32.totalorder %s24, 0
    %p227 = por %p225, %p226
    %p228 = scmp.ne.s32.totalorder %s216, %s217
    %p229 = scmp.eq.s32.totalorder %s25, 15
    %p230 = por %p228, %p229
    %p232 = scmp.ne.s32.totalorder %s217, %s231
    %p233 = scmp.eq.s32.totalorder %s25, 0
    %p234 = por %p232, %p233
    %s236 = sadd.s32 %s235, 1
    %p239 = scmp.eq.s32.totalorder %s19, 15
    %p240 = scmp.ne.s32.totalorder %s235, %s237
    %p241 = scmp.eq.s32.totalorder %s19, 0
    %p242 = por %p240, %p241
    %p243 = scmp.ne.s32.totalorder %s235, %s237
    %p244 = scmp.eq.s32.totalorder %s24, 15
    %p245 = por %p243, %p244
    %p246 = scmp.ne.s32.totalorder %s237, %s238
    %p247 = scmp.eq.s32.totalorder %s24, 0
    %p248 = por %p246, %p247
    %p249 = scmp.ne.s32.totalorder %s237, %s238
    %p250 = scmp.eq.s32.totalorder %s25, 15
    %p251 = por %p249, %p250
    %p253 = scmp.ne.s32.totalorder %s238, %s252
    %p254 = scmp.eq.s32.totalorder %s25, 0
    %p255 = por %p253, %p254
    %s257 = sadd.s32 %s256, 1
    %p260 = scmp.eq.s32.totalorder %s19, 15
    %p261 = scmp.ne.s32.totalorder %s256, %s258
    %p262 = scmp.eq.s32.totalorder %s19, 0
    %p263 = por %p261, %p262
    %p264 = scmp.ne.s32.totalorder %s256, %s258
    %p265 = scmp.eq.s32.totalorder %s24, 15
    %p266 = por %p264, %p265
    %p267 = scmp.ne.s32.totalorder %s258, %s259
    %p268 = scmp.eq.s32.totalorder %s24, 0
    %p269 = por %p267, %p268
    %p270 = scmp.ne.s32.totalorder %s258, %s259
    %p271 = scmp.eq.s32.totalorder %s25, 15
    %p272 = por %p270, %p271
    %p274 = scmp.ne.s32.totalorder %s259, %s273
    %p275 = scmp.eq.s32.totalorder %s25, 0
    %p276 = por %p274, %p275
    %s277 = ssub.s32 %s19, %s26
    %p278 = scmp.eq.s32.totalorder %s277, 0
    %s280 = sadd.s32 %s279, 1
    %s281 = scalar_select %p278, %s279, %s280
    %p284 = pneg %p278
    %p285 = scmp.eq.s32.totalorder %s19, 15
    %p286 = por %p284, %p285
    %p287 = scmp.ne.s32.totalorder %s279, %s282
    %p288 = scmp.eq.s32.totalorder %s19, 0
    %p289 = por %p287, %p288
    %p290 = scmp.ne.s32.totalorder %s279, %s282
    %p291 = scmp.eq.s32.totalorder %s24, 15
    %p292 = por %p290, %p291
    %p293 = scmp.ne.s32.totalorder %s282, %s283
    %p294 = scmp.eq.s32.totalorder %s24, 0
    %p295 = por %p293, %p294
    %p296 = scmp.ne.s32.totalorder %s282, %s283
    %p297 = scmp.eq.s32.totalorder %s25, 15
    %p298 = por %p296, %p297
    %p300 = scmp.ne.s32.totalorder %s283, %s299
    %p301 = scmp.eq.s32.totalorder %s25, 0
    %p302 = por %p300, %p301
    %s303 = ssub.s32 %s19, %s26
    %p304 = scmp.eq.s32.totalorder %s303, 0
    %s306 = sadd.s32 %s305, 1
    %s307 = scalar_select %p304, %s305, %s306
    %p310 = pneg %p304
    %p311 = scmp.eq.s32.totalorder %s19, 15
    %p312 = por %p310, %p311
    %p313 = scmp.ne.s32.totalorder %s305, %s308
    %p314 = scmp.eq.s32.totalorder %s19, 0
    %p315 = por %p313, %p314
    %p316 = scmp.ne.s32.totalorder %s305, %s308
    %p317 = scmp.eq.s32.totalorder %s24, 15
    %p318 = por %p316, %p317
    %p319 = scmp.ne.s32.totalorder %s308, %s309
    %p320 = scmp.eq.s32.totalorder %s24, 0
    %p321 = por %p319, %p320
    %p322 = scmp.ne.s32.totalorder %s308, %s309
    %p323 = scmp.eq.s32.totalorder %s25, 15
    %p324 = por %p322, %p323
    %p326 = scmp.ne.s32.totalorder %s309, %s325
    %p327 = scmp.eq.s32.totalorder %s25, 0
    %p328 = por %p326, %p327
    %p329 = scmp.le.s32.totalorder 1, %s19
    %p330 = scmp.lt.s32.totalorder %s19, 17
    %p331 = pnand %p329, %p330
    %p332 = pneg %p331
    // Predicated region
    $region9: #{preact_block_forward.2} parent=5 // pred_check
      _
    $region10: #{preact_block_forward.2} parent=5 // pred_check_branch
      %334 = sbr.rel (%p331) target = $region12
    $region11: #{preact_block_forward.2} parent=5 // pred_region
      %s335 = ssub.s32 %s19, 1
      // Predicated region
      $region13: #{preact_block_forward.2} parent=11 // pred_check
        %p336 = pneg %p122
      $region14: #{preact_block_forward.2} parent=11 // pred_check_branch
        %338 = sbr.rel (%p336) target = $region16
      $region15: #{preact_block_forward.2} parent=11 // pred_region
        _
      $region16: #{preact_block_forward.2} parent=11 // pred_fallthru
        _
      // Predicated region
      $region17: #{preact_block_forward.2} parent=11 // pred_check
        %p339 = pneg %p143
      $region18: #{preact_block_forward.2} parent=11 // pred_check_branch
        %341 = sbr.rel (%p339) target = $region20
      $region19: #{preact_block_forward.2} parent=11 // pred_region
        _
      $region20: #{preact_block_forward.2} parent=11 // pred_fallthru
        _
      // Predicated region
      $region21: #{preact_block_forward.2} parent=11 // pred_check
        %p342 = pneg %p164
      $region22: #{preact_block_forward.2} parent=11 // pred_check_branch
        %344 = sbr.rel (%p342) target = $region24
      $region23: #{preact_block_forward.2} parent=11 // pred_region
        _
      $region24: #{preact_block_forward.2} parent=11 // pred_fallthru
        _
      // Predicated region
      $region25: #{preact_block_forward.2} parent=11 // pred_check
        %p345 = pneg %p185
      $region26: #{preact_block_forward.2} parent=11 // pred_check_branch
        %347 = sbr.rel (%p345) target = $region28
      $region27: #{preact_block_forward.2} parent=11 // pred_region
        _
      $region28: #{preact_block_forward.2} parent=11 // pred_fallthru
        _
      // Predicated region
      $region29: #{preact_block_forward.2} parent=11 // pred_check
        %p348 = pneg %p206
      $region30: #{preact_block_forward.2} parent=11 // pred_check_branch
        %350 = sbr.rel (%p348) target = $region32
      $region31: #{preact_block_forward.2} parent=11 // pred_region
        _
      $region32: #{preact_block_forward.2} parent=11 // pred_fallthru
        _
      // Predicated region
      $region33: #{preact_block_forward.2} parent=11 // pred_check
        %p351 = pneg %p227
      $region34: #{preact_block_forward.2} parent=11 // pred_check_branch
        %353 = sbr.rel (%p351) target = $region36
      $region35: #{preact_block_forward.2} parent=11 // pred_region
        _
      $region36: #{preact_block_forward.2} parent=11 // pred_fallthru
        _
      // Predicated region
      $region37: #{preact_block_forward.2} parent=11 // pred_check
        %p354 = pneg %p248
      $region38: #{preact_block_forward.2} parent=11 // pred_check_branch
        %356 = sbr.rel (%p354) target = $region40
      $region39: #{preact_block_forward.2} parent=11 // pred_region
        _
      $region40: #{preact_block_forward.2} parent=11 // pred_fallthru
        _
      // Predicated region
      $region41: #{preact_block_forward.2} parent=11 // pred_check
        %p357 = pneg %p269
      $region42: #{preact_block_forward.2} parent=11 // pred_check_branch
        %359 = sbr.rel (%p357) target = $region44
      $region43: #{preact_block_forward.2} parent=11 // pred_region
        _
      $region44: #{preact_block_forward.2} parent=11 // pred_fallthru
        _
    $region12: #{preact_block_forward.2} parent=5 // pred_fallthru
      _
    %p360 = scmp.lt.s32.totalorder %s19, 16
    // Predicated region
    $region45: #{preact_block_forward.2} parent=5 // pred_check
      %p361 = pneg %p360
    $region46: #{preact_block_forward.2} parent=5 // pred_check_branch
      %363 = sbr.rel (%p361) target = $region48
    $region47: #{preact_block_forward.2} parent=5 // pred_region
      // Predicated region
      $region49: #{preact_block_forward.2} parent=47 // pred_check
        %p364 = pneg %p39
      $region50: #{preact_block_forward.2} parent=47 // pred_check_branch
        %366 = sbr.rel (%p364) target = $region52
      $region51: #{preact_block_forward.2} parent=47 // pred_region
        %p367 = scmp.lt.s32.totalorder %s19, 17
        %s368 = scalar_select %p367, %s19, 17
        %s369 = smul.addr %s368, 6
        %s370 = smul.addr %s369, 8
        %s371 = scalar_lea.vmem %s0, %s370
      $region52: #{preact_block_forward.2} parent=47 // pred_fallthru
        _
      // Predicated region
      $region53: #{preact_block_forward.2} parent=47 // pred_check
        %p372 = pneg %p67
      $region54: #{preact_block_forward.2} parent=47 // pred_check_branch
        %374 = sbr.rel (%p372) target = $region56
      $region55: #{preact_block_forward.2} parent=47 // pred_region
        %s375 = sadd.s32 %s19, 1
        %p376 = scmp.lt.s32.totalorder %s375, 17
        %s377 = scalar_select %p376, %s375, 17
        %s378 = smul.addr %s377, 6
        %s379 = smul.addr %s378, 8
        %s380 = scalar_lea.vmem %s1, %s379
        %s381 = sadd.s32 %s19, 1
      $region56: #{preact_block_forward.2} parent=47 // pred_fallthru
        _
      // Predicated region
      $region57: #{preact_block_forward.2} parent=47 // pred_check
        %p382 = pneg %p95
      $region58: #{preact_block_forward.2} parent=47 // pred_check_branch
        %384 = sbr.rel (%p382) target = $region60
      $region59: #{preact_block_forward.2} parent=47 // pred_region
        %s385 = sadd.s32 %s19, 2
        %p386 = scmp.lt.s32.totalorder %s385, 17
        %s387 = scalar_select %p386, %s385, 17
        %s388 = smul.addr %s387, 6
        %s389 = smul.addr %s388, 8
        %s390 = scalar_lea.vmem %s2, %s389
        %s391 = sadd.s32 %s19, 2
      $region60: #{preact_block_forward.2} parent=47 // pred_fallthru
        _
    $region48: #{preact_block_forward.2} parent=5 // pred_fallthru
      _
    %p392 = scmp.le.s32.totalorder 1, %s19
    %p393 = scmp.lt.s32.totalorder %s19, 17
    %p394 = pnand %p392, %p393
    %p395 = pneg %p394
    // Predicated region
    $region61: #{preact_block_forward.2} parent=5 // pred_check
      _
    $region62: #{preact_block_forward.2} parent=5 // pred_check_branch
      %397 = sbr.rel (%p394) target = $region64
    $region63: #{preact_block_forward.2} parent=5 // pred_region
      %s398 = ssub.s32 %s19, 1
      %p399 = scmp.lt.s32.totalorder %s24, 17
      %s400 = scalar_select %p399, %s24, 17
      %s401 = smul.addr %s400, 6
      %s402 = smul.addr %s401, 8
      %s403 = scalar_lea.vmem %s0, %s402
      %p404 = pneg %p45
      %p405 = pneg %p42
      %s406 = sadd.s32 %s24, 1
      %p407 = scmp.lt.s32.totalorder %s406, 17
      %s408 = scalar_select %p407, %s406, 17
      %s409 = smul.addr %s408, 6
      %s410 = smul.addr %s409, 8
      %s411 = scalar_lea.vmem %s1, %s410
      %p412 = pneg %p73
      %p413 = pneg %p70
      %s414 = sadd.s32 %s24, 2
      %p415 = scmp.lt.s32.totalorder %s414, 17
      %s416 = scalar_select %p415, %s414, 17
      %s417 = smul.addr %s416, 6
      %s418 = smul.addr %s417, 8
      %s419 = scalar_lea.vmem %s2, %s418
      %p420 = pneg %p101
      %p421 = pneg %p98
      %p422 = pneg %p122
      %p423 = pneg %p119
      %p424 = pneg %p143
      %p425 = pneg %p140
      %p426 = pneg %p164
      %p427 = pneg %p161
      %p428 = pneg %p185
      %p429 = pneg %p182
      %p430 = pneg %p206
      %p431 = pneg %p203
      %p432 = pneg %p227
      %p433 = pneg %p224
      %p434 = pneg %p248
      %p435 = pneg %p245
      %p436 = pneg %p269
      %p437 = pneg %p266
      %p438 = pneg %p295
      %p439 = pneg %p292
      %p440 = scmp.lt.s32.totalorder %s24, 15
      %s441 = scalar_select %p440, %s24, 15
      %s442 = smul.addr %s441, 4
      %s443 = smul.addr %s442, 4
      %s444 = scalar_lea.vmem %s11, %s443
      %p445 = pneg %p321
      %p446 = pneg %p318
      %p447 = scmp.lt.s32.totalorder %s24, 15
      %s448 = scalar_select %p447, %s24, 15
      %s449 = smul.addr %s448, 4
      %s450 = smul.addr %s449, 8
      %s451 = scalar_lea.vmem %s12, %s450
      %p452 = scmp.lt.s32.totalorder %s24, 17
      %s453 = scalar_select %p452, %s24, 17
      %s454 = smul.addr %s453, 6
      %s455 = smul.addr %s454, 8
      %s456 = scalar_lea.vmem %s0, %s455
      %s457 = sadd.s32 %s24, 1
      %p458 = scmp.lt.s32.totalorder %s457, 17
      %s459 = scalar_select %p458, %s457, 17
      %s460 = smul.addr %s459, 6
      %s461 = smul.addr %s460, 8
      %s462 = scalar_lea.vmem %s1, %s461
      %s463 = sadd.s32 %s24, 1
      %s464 = sadd.s32 %s24, 2
      %p465 = scmp.lt.s32.totalorder %s464, 17
      %s466 = scalar_select %p465, %s464, 17
      %s467 = smul.addr %s466, 6
      %s468 = smul.addr %s467, 8
      %s469 = scalar_lea.vmem %s2, %s468
      %s470 = sadd.s32 %s24, 2
      %p471 = scmp.lt.s32.totalorder %s24, 15
      %s472 = scalar_select %p471, %s24, 15
      %s473 = smul.addr %s472, 4
      %s474 = smul.addr %s473, 4
      %s475 = scalar_lea.vmem %s11, %s474
      %p476 = scmp.lt.s32.totalorder %s24, 15
      %s477 = scalar_select %p476, %s24, 15
      %s478 = smul.addr %s477, 4
      %s479 = smul.addr %s478, 8
      %s480 = scalar_lea.vmem %s12, %s479
      %v482 = vld [vmem:[%s5] sm:$0x1]
      %v483 = vld [vmem:[%s6] sm:$0x1]
      %p484 = scmp.ge.s32.totalorder %s24, 1
      %p485 = scmp.le.s32.totalorder %s24, 16
      %p486 = pnand %p484, %p485
      %p487 = pneg %p486
      %s488 = scalar_select %p487, 1, 0
      %s489 = scvt.s32.f32 %s488
      %v490 = vld [vmem:[%s3] sm:$0xff]
      %v491 = vld [vmem:[%s3 + $0x8] sm:$0xff]
      %v492 = vld [vmem:[%s3 + $0x10] sm:$0x3]
      %v493 = vstv %s489
      %v494 = vmul.f32 %v490, %v493
      %v495 = vmul.f32 %v491, %v493
      %v496 = vmul.f32 %v492, %v493
      %v497 = vld [vmem:[%s456] sm:$0xff]
      %v498 = vld [vmem:[%s456 + $0x8] sm:$0xff]
      %v499 = vld [vmem:[%s456 + $0x10] sm:$0x3]
      %v500 = vld [vmem:[%s456 + $0x18] sm:$0xff]
      %v501 = vld [vmem:[%s456 + $0x20] sm:$0xff]
      %v502 = vld [vmem:[%s456 + $0x28] sm:$0x3]
      %v504 = vperm.slane %v482, 0
      %v506 = vmul.f32 %v497, %v504
      %v507 = vmul.f32 %v498, %v504
      %v508 = vmul.f32 %v499, %v504
      %v509 = vmul.f32 %v500, %v504
      %v510 = vmul.f32 %v501, %v504
      %v511 = vmul.f32 %v502, %v504
      %v513 = vperm.slane %v483, 0
      %v515 = vadd.f32 %v506, %v513
      %v516 = vadd.f32 %v507, %v513
      %v517 = vadd.f32 %v508, %v513
      %v518 = vadd.f32 %v509, %v513
      %v519 = vadd.f32 %v510, %v513
      %v520 = vadd.f32 %v511, %v513
      %v521 = vmax.f32 %v515, 0.0
      %v522 = vmax.f32 %v516, 0.0
      %v523 = vmax.f32 %v517, 0.0
      %v524 = vmax.f32 %v518, 0.0
      %v525 = vmax.f32 %v519, 0.0
      %v526 = vmax.f32 %v520, 0.0
      %v527 = vmul.f32 %v521, %v494
      %v528 = vmul.f32 %v522, %v495
      %v529 = vmul.f32 %v523, %v496
      %v530 = vmul.f32 %v524, %v494
      %v531 = vmul.f32 %v525, %v495
      %v532 = vmul.f32 %v526, %v496
      %v533 = vpack.c.bf16 %v527, %v527
      %v534 = vpack.c.bf16 %v528, %v528
      %v535 = vpack.c.bf16 %v530, %v530
      %v536 = vpack.c.bf16 %v531, %v531
      %v537 = vld [vmem:[%s4] sm:$0x3]
      %v538 = vpack.c.bf16 %v529, %v529
      %v539 = vpack.c.bf16 %v532, %v532
      %vm540 = vsmask.f32 3328
      %vm541 = vsmask.f32 7440
      %vm542 = vmor %vm540, %vm541
      %v544 = vshrl.u32 %v533, 16
      %v546 = vrot.slane %v544, 4
      %v547 = vshll.u32 %v533, 16
      %v549 = vrot.slane %v547, 5
      %v550 = vor.u32 %v546, %v549
      %v551 = vrot.slane %v550, 4
      %v553 = vshll.u32 %v534, 16
      %v555 = vrot.slane %v553, 5
      %v556 = vsel %vm542, %v551, %v555
      %v557 = vshrl.u32 %v534, 16
      %v559 = vrot.slane %v557, 4
      %v560 = vor.u32 %v559, %v555
      %v561 = vrot.slane %v560, 4
      %v563 = vshll.u32 %v538, 16
      %v565 = vrot.slane %v563, 5
      %v566 = vsel %vm542, %v561, %v565
      %v568 = vshrl.u32 %v535, 16
      %v570 = vrot.slane %v568, 4
      %v571 = vshll.u32 %v535, 16
      %v573 = vrot.slane %v571, 5
      %v574 = vor.u32 %v570, %v573
      %v575 = vrot.slane %v574, 4
      %v577 = vshll.u32 %v536, 16
      %v579 = vrot.slane %v577, 5
      %v580 = vsel %vm542, %v575, %v579
      %v581 = vshrl.u32 %v536, 16
      %v583 = vrot.slane %v581, 4
      %v584 = vor.u32 %v583, %v579
      %v585 = vrot.slane %v584, 4
      %v587 = vshll.u32 %v539, 16
      %v589 = vrot.slane %v587, 5
      %v590 = vsel %vm542, %v585, %v589
      %s591 = scalar_lea.vmem %s4, 2
      %v592 = vld [vmem:[%s591] sm:$0x3]
      %v593 = vunpack.c.l.b16 %v556
      %v594 = vunpack.c.l.b16 %v566
      %v595 = vunpack.c.l.b16 %v580
      %v596 = vunpack.c.l.b16 %v590
      %v597 = vpack.c.b16 %v594, %v593
      %v598 = vpack.c.b16 %v596, %v595
      %vm599 = vcmask 31744
      %v601 = vsel %vm599, %v597, 0
      %v604 = vsel %vm599, %v598, 0
      %vm606 = vcmask 1041408
      %v608 = vsel %vm606, %v592, 0
      %610 = vmatpush.bf16.msra.mxu0 0
      %611 = vmatpush.bf16.msra.mxu0 0
      %612 = vmatpush.bf16.msra.mxu0 0
      %613 = vmatpush.bf16.msra.mxu0 0
      %614 = vmatpush.bf16.msra.mxu0 0
      %615 = vmatpush.bf16.msra.mxu0 0
      %616 = vmatpush.bf16.msra.mxu0 0
      %617 = vmatpush.bf16.msra.mxu0 %v608
      %618 = vmatmul.bf16.gmra.mxu0 %v601
      %v619 = vpop.f32.mrf.mxu0
      %v620 = vadd.f32 0.0, %v619
      %v621 = vpop.f32.mrf.mxu0
      %v622 = vadd.f32 0.0, %v621
      %623 = vmatmul.bf16.gmra.mxu0 %v604
      %v624 = vpop.f32.mrf.mxu0
      %v625 = vadd.f32 0.0, %v624
      %v626 = vpop.f32.mrf.mxu0
      %v627 = vadd.f32 0.0, %v626
      %628 = vdwg.mxu0
      %v633 = vunpack.c.l.b16 %v533
      %v634 = vunpack.c.l.b16 %v534
      %v635 = vunpack.c.l.b16 %v535
      %v636 = vunpack.c.l.b16 %v536
      %v637 = vpack.c.b16 %v634, %v633
      %v638 = vpack.c.b16 %v636, %v635
      %v640 = vsel %vm599, %v637, 0
      %v643 = vsel %vm599, %v638, 0
      %v646 = vsel %vm606, %v537, 0
      %648 = vmatpush.bf16.msra.mxu0 0
      %649 = vmatpush.bf16.msra.mxu0 0
      %650 = vmatpush.bf16.msra.mxu0 0
      %651 = vmatpush.bf16.msra.mxu0 0
      %652 = vmatpush.bf16.msra.mxu0 0
      %653 = vmatpush.bf16.msra.mxu0 0
      %654 = vmatpush.bf16.msra.mxu0 0
      %655 = vmatpush.bf16.msra.mxu0 %v646
      %656 = vmatmul.bf16.gmra.mxu0 %v640
      %v657 = vpop.f32.mrf.mxu0
      %v658 = vadd.f32 %v620, %v657
      %v659 = vpop.f32.mrf.mxu0
      %v660 = vadd.f32 %v622, %v659
      %661 = vmatmul.bf16.gmra.mxu0 %v643
      %v662 = vpop.f32.mrf.mxu0
      %v663 = vadd.f32 %v625, %v662
      %v664 = vpop.f32.mrf.mxu0
      %v665 = vadd.f32 %v627, %v664
      %666 = vdwg.mxu0
      %vm669 = vcmask 1042432
      %vm670 = vcmask 1046532
      %vm671 = vmor %vm669, %vm670
      %v672 = vrot.slane %v533, 5
      %v673 = vrot.slane %v672, 4
      %v674 = vrot.slane %v534, 5
      %v675 = vsel %vm671, %v673, %v674
      %v676 = vrot.slane %v674, 4
      %v677 = vrot.slane %v538, 5
      %v678 = vsel %vm671, %v676, %v677
      %v679 = vrot.slane %v535, 5
      %v680 = vrot.slane %v679, 4
      %v681 = vrot.slane %v536, 5
      %v682 = vsel %vm671, %v680, %v681
      %v683 = vrot.slane %v681, 4
      %v684 = vrot.slane %v539, 5
      %v685 = vsel %vm671, %v683, %v684
      %s686 = scalar_lea.vmem %s4, 4
      %v687 = vld [vmem:[%s686] sm:$0x3]
      %v688 = vunpack.c.l.b16 %v675
      %v689 = vunpack.c.l.b16 %v678
      %v690 = vunpack.c.l.b16 %v682
      %v691 = vunpack.c.l.b16 %v685
      %v692 = vpack.c.b16 %v689, %v688
      %v693 = vpack.c.b16 %v691, %v690
      %v695 = vsel %vm599, %v692, 0
      %v698 = vsel %vm599, %v693, 0
      %v701 = vsel %vm606, %v687, 0
      %703 = vmatpush.bf16.msra.mxu0 0
      %704 = vmatpush.bf16.msra.mxu0 0
      %705 = vmatpush.bf16.msra.mxu0 0
      %706 = vmatpush.bf16.msra.mxu0 0
      %707 = vmatpush.bf16.msra.mxu0 0
      %708 = vmatpush.bf16.msra.mxu0 0
      %709 = vmatpush.bf16.msra.mxu0 0
      %710 = vmatpush.bf16.msra.mxu0 %v701
      %711 = vmatmul.bf16.gmra.mxu0 %v695
      %v712 = vpop.f32.mrf.mxu0
      %v713 = vadd.f32 0.0, %v712
      %v714 = vpop.f32.mrf.mxu0
      %v715 = vadd.f32 0.0, %v714
      %716 = vmatmul.bf16.gmra.mxu0 %v698
      %v717 = vpop.f32.mrf.mxu0
      %v718 = vadd.f32 0.0, %v717
      %v719 = vpop.f32.mrf.mxu0
      %v720 = vadd.f32 0.0, %v719
      %721 = vdwg.mxu0
      %v722 = vadd.f32 %v658, %v713
      %v723 = vadd.f32 %v660, %v715
      %v724 = vadd.f32 %v663, %v718
      %v725 = vadd.f32 %v665, %v720
      %s726 = sadd.s32 %s24, 1
      %p727 = scmp.ge.s32.totalorder %s726, 1
      %p728 = scmp.le.s32.totalorder %s726, 16
      %p729 = pnand %p727, %p728
      %p730 = pneg %p729
      %s731 = scalar_select %p730, 1, 0
      %s732 = scvt.s32.f32 %s731
      %v733 = vstv %s732
      %v734 = vmul.f32 %v490, %v733
      %v735 = vmul.f32 %v491, %v733
      %v736 = vmul.f32 %v492, %v733
      %v737 = vld [vmem:[%s462] sm:$0xff]
      %v738 = vld [vmem:[%s462 + $0x8] sm:$0xff]
      %v739 = vld [vmem:[%s462 + $0x10] sm:$0x3]
      %v740 = vld [vmem:[%s462 + $0x18] sm:$0xff]
      %v741 = vld [vmem:[%s462 + $0x20] sm:$0xff]
      %v742 = vld [vmem:[%s462 + $0x28] sm:$0x3]
      %v743 = vmul.f32 %v737, %v504
      %v744 = vmul.f32 %v738, %v504
      %v745 = vmul.f32 %v739, %v504
      %v746 = vmul.f32 %v740, %v504
      %v747 = vmul.f32 %v741, %v504
      %v748 = vmul.f32 %v742, %v504
      %v749 = vadd.f32 %v743, %v513
      %v750 = vadd.f32 %v744, %v513
      %v751 = vadd.f32 %v745, %v513
      %v752 = vadd.f32 %v746, %v513
      %v753 = vadd.f32 %v747, %v513
      %v754 = vadd.f32 %v748, %v513
      %v755 = vmax.f32 %v749, 0.0
      %v756 = vmax.f32 %v750, 0.0
      %v757 = vmax.f32 %v751, 0.0
      %v758 = vmax.f32 %v752, 0.0
      %v759 = vmax.f32 %v753, 0.0
      %v760 = vmax.f32 %v754, 0.0
      %v761 = vmul.f32 %v755, %v734
      %v762 = vmul.f32 %v756, %v735
      %v763 = vmul.f32 %v757, %v736
      %v764 = vmul.f32 %v758, %v734
      %v765 = vmul.f32 %v759, %v735
      %v766 = vmul.f32 %v760, %v736
      %v767 = vpack.c.bf16 %v761, %v761
      %v768 = vpack.c.bf16 %v762, %v762
      %v769 = vpack.c.bf16 %v764, %v764
      %v770 = vpack.c.bf16 %v765, %v765
      %s771 = scalar_lea.vmem %s4, 6
      %v772 = vld [vmem:[%s771] sm:$0x3]
      %v777 = vunpack.c.l.b16 %v767
      %v778 = vunpack.c.l.b16 %v768
      %v779 = vunpack.c.l.b16 %v769
      %v780 = vunpack.c.l.b16 %v770
      %v781 = vpack.c.b16 %v778, %v777
      %v782 = vpack.c.b16 %v780, %v779
      %v784 = vsel %vm599, %v781, 0
      %v787 = vsel %vm599, %v782, 0
      %v790 = vsel %vm606, %v772, 0
      %792 = vmatpush.bf16.msra.mxu0 0
      %793 = vmatpush.bf16.msra.mxu0 0
      %794 = vmatpush.bf16.msra.mxu0 0
      %795 = vmatpush.bf16.msra.mxu0 0
      %796 = vmatpush.bf16.msra.mxu0 0
      %797 = vmatpush.bf16.msra.mxu0 0
      %798 = vmatpush.bf16.msra.mxu0 0
      %799 = vmatpush.bf16.msra.mxu0 %v790
      %800 = vmatmul.bf16.gmra.mxu0 %v784
      %v801 = vpop.f32.mrf.mxu0
      %v802 = vadd.f32 0.0, %v801
      %v803 = vpop.f32.mrf.mxu0
      %v804 = vadd.f32 0.0, %v803
      %805 = vmatmul.bf16.gmra.mxu0 %v787
      %v806 = vpop.f32.mrf.mxu0
      %v807 = vadd.f32 0.0, %v806
      %v808 = vpop.f32.mrf.mxu0
      %v809 = vadd.f32 0.0, %v808
      %810 = vdwg.mxu0
      %v811 = vadd.f32 %v722, %v802
      %v812 = vadd.f32 %v723, %v804
      %v813 = vadd.f32 %v724, %v807
      %v814 = vadd.f32 %v725, %v809
      %v815 = vpack.c.bf16 %v763, %v763
      %v816 = vpack.c.bf16 %v766, %v766
      %v818 = vshrl.u32 %v767, 16
      %v820 = vrot.slane %v818, 4
      %v821 = vshll.u32 %v767, 16
      %v823 = vrot.slane %v821, 5
      %v824 = vor.u32 %v820, %v823
      %v825 = vrot.slane %v824, 4
      %v827 = vshll.u32 %v768, 16
      %v829 = vrot.slane %v827, 5
      %v830 = vsel %vm542, %v825, %v829
      %v831 = vshrl.u32 %v768, 16
      %v833 = vrot.slane %v831, 4
      %v834 = vor.u32 %v833, %v829
      %v835 = vrot.slane %v834, 4
      %v837 = vshll.u32 %v815, 16
      %v839 = vrot.slane %v837, 5
      %v840 = vsel %vm542, %v835, %v839
      %v842 = vshrl.u32 %v769, 16
      %v844 = vrot.slane %v842, 4
      %v845 = vshll.u32 %v769, 16
      %v847 = vrot.slane %v845, 5
      %v848 = vor.u32 %v844, %v847
      %v849 = vrot.slane %v848, 4
      %v851 = vshll.u32 %v770, 16
      %v853 = vrot.slane %v851, 5
      %v854 = vsel %vm542, %v849, %v853
      %v855 = vshrl.u32 %v770, 16
      %v857 = vrot.slane %v855, 4
      %v858 = vor.u32 %v857, %v853
      %v859 = vrot.slane %v858, 4
      %v861 = vshll.u32 %v816, 16
      %v863 = vrot.slane %v861, 5
      %v864 = vsel %vm542, %v859, %v863
      %s865 = scalar_lea.vmem %s4, 8
      %v866 = vld [vmem:[%s865] sm:$0x3]
      %v867 = vunpack.c.l.b16 %v830
      %v868 = vunpack.c.l.b16 %v840
      %v869 = vunpack.c.l.b16 %v854
      %v870 = vunpack.c.l.b16 %v864
      %v871 = vpack.c.b16 %v868, %v867
      %v872 = vpack.c.b16 %v870, %v869
      %v874 = vsel %vm599, %v871, 0
      %v877 = vsel %vm599, %v872, 0
      %v880 = vsel %vm606, %v866, 0
      %882 = vmatpush.bf16.msra.mxu0 0
      %883 = vmatpush.bf16.msra.mxu0 0
      %884 = vmatpush.bf16.msra.mxu0 0
      %885 = vmatpush.bf16.msra.mxu0 0
      %886 = vmatpush.bf16.msra.mxu0 0
      %887 = vmatpush.bf16.msra.mxu0 0
      %888 = vmatpush.bf16.msra.mxu0 0
      %889 = vmatpush.bf16.msra.mxu0 %v880
      %890 = vmatmul.bf16.gmra.mxu0 %v874
      %v891 = vpop.f32.mrf.mxu0
      %v892 = vadd.f32 0.0, %v891
      %v893 = vpop.f32.mrf.mxu0
      %v894 = vadd.f32 0.0, %v893
      %895 = vmatmul.bf16.gmra.mxu0 %v877
      %v896 = vpop.f32.mrf.mxu0
      %v897 = vadd.f32 0.0, %v896
      %v898 = vpop.f32.mrf.mxu0
      %v899 = vadd.f32 0.0, %v898
      %900 = vdwg.mxu0
      %v901 = vadd.f32 %v811, %v892
      %v902 = vadd.f32 %v812, %v894
      %v903 = vadd.f32 %v813, %v897
      %v904 = vadd.f32 %v814, %v899
      %v905 = vld [vmem:[%s10] sm:$0x3]
      %v906 = vld [vmem:[%s9] sm:$0x1]
      %v908 = vperm.slane %v906, 0
      %v911 = vsel %vm606, %v905, 0
      %913 = vmatpush.bf16.msra.mxu0 0
      %914 = vmatpush.bf16.msra.mxu0 0
      %915 = vmatpush.bf16.msra.mxu0 0
      %916 = vmatpush.bf16.msra.mxu0 0
      %917 = vmatpush.bf16.msra.mxu0 0
      %918 = vmatpush.bf16.msra.mxu0 0
      %919 = vmatpush.bf16.msra.mxu0 0
      %920 = vmatpush.bf16.msra.mxu0 %v911
      %921 = vmatmul.bf16.gmra.mxu0 %v874
      %v922 = vpop.f32.mrf.mxu0
      %v923 = vadd.f32 %v908, %v922
      %v924 = vpop.f32.mrf.mxu0
      %v925 = vadd.f32 %v908, %v924
      %926 = vmatmul.bf16.gmra.mxu0 %v877
      %v927 = vpop.f32.mrf.mxu0
      %v928 = vadd.f32 %v908, %v927
      %v929 = vpop.f32.mrf.mxu0
      %v930 = vadd.f32 %v908, %v929
      %931 = vdwg.mxu0
      %vm932 = vcmask 64512
      %933 = vst.msk [vmem:[%s480] sm:$0xff] %vm932, %v923
      %934 = vst.msk [vmem:[%s480 + $0x8] sm:$0xff] %vm932, %v925
      %935 = vst.msk [vmem:[%s480 + $0x10] sm:$0xff] %vm932, %v928
      %936 = vst.msk [vmem:[%s480 + $0x18] sm:$0xff] %vm932, %v930
      %v939 = vrot.slane %v767, 5
      %v940 = vrot.slane %v939, 4
      %v941 = vrot.slane %v768, 5
      %v942 = vsel %vm671, %v940, %v941
      %v943 = vrot.slane %v941, 4
      %v944 = vrot.slane %v815, 5
      %v945 = vsel %vm671, %v943, %v944
      %v946 = vrot.slane %v769, 5
      %v947 = vrot.slane %v946, 4
      %v948 = vrot.slane %v770, 5
      %v949 = vsel %vm671, %v947, %v948
      %v950 = vrot.slane %v948, 4
      %v951 = vrot.slane %v816, 5
      %v952 = vsel %vm671, %v950, %v951
      %s953 = scalar_lea.vmem %s4, 10
      %v954 = vld [vmem:[%s953] sm:$0x3]
      %v955 = vunpack.c.l.b16 %v942
      %v956 = vunpack.c.l.b16 %v945
      %v957 = vunpack.c.l.b16 %v949
      %v958 = vunpack.c.l.b16 %v952
      %v959 = vpack.c.b16 %v956, %v955
      %v960 = vpack.c.b16 %v958, %v957
      %v962 = vsel %vm599, %v959, 0
      %v965 = vsel %vm599, %v960, 0
      %v968 = vsel %vm606, %v954, 0
      %970 = vmatpush.bf16.msra.mxu0 0
      %971 = vmatpush.bf16.msra.mxu0 0
      %972 = vmatpush.bf16.msra.mxu0 0
      %973 = vmatpush.bf16.msra.mxu0 0
      %974 = vmatpush.bf16.msra.mxu0 0
      %975 = vmatpush.bf16.msra.mxu0 0
      %976 = vmatpush.bf16.msra.mxu0 0
      %977 = vmatpush.bf16.msra.mxu0 %v968
      %978 = vmatmul.bf16.gmra.mxu0 %v962
      %v979 = vpop.f32.mrf.mxu0
      %v980 = vadd.f32 0.0, %v979
      %v981 = vpop.f32.mrf.mxu0
      %v982 = vadd.f32 0.0, %v981
      %983 = vmatmul.bf16.gmra.mxu0 %v965
      %v984 = vpop.f32.mrf.mxu0
      %v985 = vadd.f32 0.0, %v984
      %v986 = vpop.f32.mrf.mxu0
      %v987 = vadd.f32 0.0, %v986
      %988 = vdwg.mxu0
      %v989 = vadd.f32 %v901, %v980
      %v990 = vadd.f32 %v902, %v982
      %v991 = vadd.f32 %v903, %v985
      %v992 = vadd.f32 %v904, %v987
      %s993 = sadd.s32 %s24, 2
      %p994 = scmp.ge.s32.totalorder %s993, 1
      %p995 = scmp.le.s32.totalorder %s993, 16
      %p996 = pnand %p994, %p995
      %p997 = pneg %p996
      %s998 = scalar_select %p997, 1, 0
      %s999 = scvt.s32.f32 %s998
      %v1000 = vld [vmem:[%s3] sm:$0xff]
      %v1001 = vld [vmem:[%s3 + $0x8] sm:$0xff]
      %v1002 = vld [vmem:[%s3 + $0x10] sm:$0x3]
      %v1003 = vstv %s999
      %v1004 = vmul.f32 %v1000, %v1003
      %v1005 = vmul.f32 %v1001, %v1003
      %v1006 = vmul.f32 %v1002, %v1003
      %v1007 = vld [vmem:[%s469] sm:$0xff]
      %v1008 = vld [vmem:[%s469 + $0x8] sm:$0xff]
      %v1009 = vld [vmem:[%s469 + $0x10] sm:$0x3]
      %v1010 = vld [vmem:[%s469 + $0x18] sm:$0xff]
      %v1011 = vld [vmem:[%s469 + $0x20] sm:$0xff]
      %v1012 = vld [vmem:[%s469 + $0x28] sm:$0x3]
      %v1013 = vmul.f32 %v1007, %v504
      %v1014 = vmul.f32 %v1008, %v504
      %v1015 = vmul.f32 %v1009, %v504
      %v1016 = vmul.f32 %v1010, %v504
      %v1017 = vmul.f32 %v1011, %v504
      %v1018 = vmul.f32 %v1012, %v504
      %v1019 = vadd.f32 %v1013, %v513
      %v1020 = vadd.f32 %v1014, %v513
      %v1021 = vadd.f32 %v1015, %v513
      %v1022 = vadd.f32 %v1016, %v513
      %v1023 = vadd.f32 %v1017, %v513
      %v1024 = vadd.f32 %v1018, %v513
      %v1025 = vmax.f32 %v1019, 0.0
      %v1026 = vmax.f32 %v1020, 0.0
      %v1027 = vmax.f32 %v1021, 0.0
      %v1028 = vmax.f32 %v1022, 0.0
      %v1029 = vmax.f32 %v1023, 0.0
      %v1030 = vmax.f32 %v1024, 0.0
      %v1031 = vmul.f32 %v1025, %v1004
      %v1032 = vmul.f32 %v1026, %v1005
      %v1033 = vmul.f32 %v1027, %v1006
      %v1034 = vmul.f32 %v1028, %v1004
      %v1035 = vmul.f32 %v1029, %v1005
      %v1036 = vmul.f32 %v1030, %v1006
      %v1037 = vpack.c.bf16 %v1031, %v1031
      %v1038 = vpack.c.bf16 %v1032, %v1032
      %v1039 = vpack.c.bf16 %v1034, %v1034
      %v1040 = vpack.c.bf16 %v1035, %v1035
      %s1041 = scalar_lea.vmem %s4, 12
      %v1042 = vld [vmem:[%s1041] sm:$0x3]
      %v1047 = vunpack.c.l.b16 %v1037
      %v1048 = vunpack.c.l.b16 %v1038
      %v1049 = vunpack.c.l.b16 %v1039
      %v1050 = vunpack.c.l.b16 %v1040
      %v1051 = vpack.c.b16 %v1048, %v1047
      %v1052 = vpack.c.b16 %v1050, %v1049
      %v1054 = vsel %vm599, %v1051, 0
      %v1057 = vsel %vm599, %v1052, 0
      %v1060 = vsel %vm606, %v1042, 0
      %1062 = vmatpush.bf16.msra.mxu0 0
      %1063 = vmatpush.bf16.msra.mxu0 0
      %1064 = vmatpush.bf16.msra.mxu0 0
      %1065 = vmatpush.bf16.msra.mxu0 0
      %1066 = vmatpush.bf16.msra.mxu0 0
      %1067 = vmatpush.bf16.msra.mxu0 0
      %1068 = vmatpush.bf16.msra.mxu0 0
      %1069 = vmatpush.bf16.msra.mxu0 %v1060
      %1070 = vmatmul.bf16.gmra.mxu0 %v1054
      %v1071 = vpop.f32.mrf.mxu0
      %v1072 = vadd.f32 0.0, %v1071
      %v1073 = vpop.f32.mrf.mxu0
      %v1074 = vadd.f32 0.0, %v1073
      %1075 = vmatmul.bf16.gmra.mxu0 %v1057
      %v1076 = vpop.f32.mrf.mxu0
      %v1077 = vadd.f32 0.0, %v1076
      %v1078 = vpop.f32.mrf.mxu0
      %v1079 = vadd.f32 0.0, %v1078
      %1080 = vdwg.mxu0
      %v1081 = vadd.f32 %v989, %v1072
      %v1082 = vadd.f32 %v990, %v1074
      %v1083 = vadd.f32 %v991, %v1077
      %v1084 = vadd.f32 %v992, %v1079
      %v1085 = vpack.c.bf16 %v1033, %v1033
      %v1086 = vpack.c.bf16 %v1036, %v1036
      %v1088 = vshrl.u32 %v1037, 16
      %v1090 = vrot.slane %v1088, 4
      %v1091 = vshll.u32 %v1037, 16
      %v1093 = vrot.slane %v1091, 5
      %v1094 = vor.u32 %v1090, %v1093
      %v1095 = vrot.slane %v1094, 4
      %v1097 = vshll.u32 %v1038, 16
      %v1099 = vrot.slane %v1097, 5
      %v1100 = vsel %vm542, %v1095, %v1099
      %v1101 = vshrl.u32 %v1038, 16
      %v1103 = vrot.slane %v1101, 4
      %v1104 = vor.u32 %v1103, %v1099
      %v1105 = vrot.slane %v1104, 4
      %v1107 = vshll.u32 %v1085, 16
      %v1109 = vrot.slane %v1107, 5
      %v1110 = vsel %vm542, %v1105, %v1109
      %v1112 = vshrl.u32 %v1039, 16
      %v1114 = vrot.slane %v1112, 4
      %v1115 = vshll.u32 %v1039, 16
      %v1117 = vrot.slane %v1115, 5
      %v1118 = vor.u32 %v1114, %v1117
      %v1119 = vrot.slane %v1118, 4
      %v1121 = vshll.u32 %v1040, 16
      %v1123 = vrot.slane %v1121, 5
      %v1124 = vsel %vm542, %v1119, %v1123
      %v1125 = vshrl.u32 %v1040, 16
      %v1127 = vrot.slane %v1125, 4
      %v1128 = vor.u32 %v1127, %v1123
      %v1129 = vrot.slane %v1128, 4
      %v1131 = vshll.u32 %v1086, 16
      %v1133 = vrot.slane %v1131, 5
      %v1134 = vsel %vm542, %v1129, %v1133
      %s1135 = scalar_lea.vmem %s4, 14
      %v1136 = vld [vmem:[%s1135] sm:$0x3]
      %v1137 = vunpack.c.l.b16 %v1100
      %v1138 = vunpack.c.l.b16 %v1110
      %v1139 = vunpack.c.l.b16 %v1124
      %v1140 = vunpack.c.l.b16 %v1134
      %v1141 = vpack.c.b16 %v1138, %v1137
      %v1142 = vpack.c.b16 %v1140, %v1139
      %v1144 = vsel %vm599, %v1141, 0
      %v1147 = vsel %vm599, %v1142, 0
      %v1150 = vsel %vm606, %v1136, 0
      %1152 = vmatpush.bf16.msra.mxu0 0
      %1153 = vmatpush.bf16.msra.mxu0 0
      %1154 = vmatpush.bf16.msra.mxu0 0
      %1155 = vmatpush.bf16.msra.mxu0 0
      %1156 = vmatpush.bf16.msra.mxu0 0
      %1157 = vmatpush.bf16.msra.mxu0 0
      %1158 = vmatpush.bf16.msra.mxu0 0
      %1159 = vmatpush.bf16.msra.mxu0 %v1150
      %1160 = vmatmul.bf16.gmra.mxu0 %v1144
      %v1161 = vpop.f32.mrf.mxu0
      %v1162 = vadd.f32 0.0, %v1161
      %v1163 = vpop.f32.mrf.mxu0
      %v1164 = vadd.f32 0.0, %v1163
      %1165 = vmatmul.bf16.gmra.mxu0 %v1147
      %v1166 = vpop.f32.mrf.mxu0
      %v1167 = vadd.f32 0.0, %v1166
      %v1168 = vpop.f32.mrf.mxu0
      %v1169 = vadd.f32 0.0, %v1168
      %1170 = vdwg.mxu0
      %v1171 = vadd.f32 %v1081, %v1162
      %v1172 = vadd.f32 %v1082, %v1164
      %v1173 = vadd.f32 %v1083, %v1167
      %v1174 = vadd.f32 %v1084, %v1169
      %v1177 = vrot.slane %v1037, 5
      %v1178 = vrot.slane %v1177, 4
      %v1179 = vrot.slane %v1038, 5
      %v1180 = vsel %vm671, %v1178, %v1179
      %v1181 = vrot.slane %v1179, 4
      %v1182 = vrot.slane %v1085, 5
      %v1183 = vsel %vm671, %v1181, %v1182
      %v1184 = vrot.slane %v1039, 5
      %v1185 = vrot.slane %v1184, 4
      %v1186 = vrot.slane %v1040, 5
      %v1187 = vsel %vm671, %v1185, %v1186
      %v1188 = vrot.slane %v1186, 4
      %v1189 = vrot.slane %v1086, 5
      %v1190 = vsel %vm671, %v1188, %v1189
      %s1191 = scalar_lea.vmem %s4, 16
      %v1192 = vld [vmem:[%s1191] sm:$0x3]
      %v1193 = vunpack.c.l.b16 %v1180
      %v1194 = vunpack.c.l.b16 %v1183
      %v1195 = vunpack.c.l.b16 %v1187
      %v1196 = vunpack.c.l.b16 %v1190
      %v1197 = vpack.c.b16 %v1194, %v1193
      %v1198 = vpack.c.b16 %v1196, %v1195
      %v1200 = vsel %vm599, %v1197, 0
      %v1203 = vsel %vm599, %v1198, 0
      %v1206 = vsel %vm606, %v1192, 0
      %1208 = vmatpush.bf16.msra.mxu0 0
      %1209 = vmatpush.bf16.msra.mxu0 0
      %1210 = vmatpush.bf16.msra.mxu0 0
      %1211 = vmatpush.bf16.msra.mxu0 0
      %1212 = vmatpush.bf16.msra.mxu0 0
      %1213 = vmatpush.bf16.msra.mxu0 0
      %1214 = vmatpush.bf16.msra.mxu0 0
      %1215 = vmatpush.bf16.msra.mxu0 %v1206
      %1216 = vmatmul.bf16.gmra.mxu0 %v1200
      %v1217 = vpop.f32.mrf.mxu0
      %v1218 = vadd.f32 0.0, %v1217
      %v1219 = vpop.f32.mrf.mxu0
      %v1220 = vadd.f32 0.0, %v1219
      %1221 = vmatmul.bf16.gmra.mxu0 %v1203
      %v1222 = vpop.f32.mrf.mxu0
      %v1223 = vadd.f32 0.0, %v1222
      %v1224 = vpop.f32.mrf.mxu0
      %v1225 = vadd.f32 0.0, %v1224
      %1226 = vdwg.mxu0
      %v1227 = vadd.f32 %v1171, %v1218
      %v1228 = vadd.f32 %v1172, %v1220
      %v1229 = vadd.f32 %v1173, %v1223
      %v1230 = vadd.f32 %v1174, %v1225
      %v1231 = vld [vmem:[%s7] sm:$0x1]
      %v1233 = vperm.slane %v1231, 0
      %v1235 = vmul.f32 %v1227, %v1233
      %v1236 = vmul.f32 %v1228, %v1233
      %v1237 = vmul.f32 %v1229, %v1233
      %v1238 = vmul.f32 %v1230, %v1233
      %v1239 = vld [vmem:[%s8] sm:$0x1]
      %v1241 = vperm.slane %v1239, 0
      %v1243 = vadd.f32 %v1235, %v1241
      %v1244 = vadd.f32 %v1236, %v1241
      %v1245 = vadd.f32 %v1237, %v1241
      %v1246 = vadd.f32 %v1238, %v1241
      %v1247 = vmax.f32 %v1243, 0.0
      %v1248 = vmax.f32 %v1244, 0.0
      %v1249 = vmax.f32 %v1245, 0.0
      %v1250 = vmax.f32 %v1246, 0.0
      %v1251 = vpack.c.bf16 %v1247, %v1247
      %v1252 = vpack.c.bf16 %v1248, %v1248
      %v1253 = vpack.c.bf16 %v1249, %v1249
      %v1254 = vpack.c.bf16 %v1250, %v1250
      %vm1255 = vcmask 60416
      %1256 = vst.msk [vmem:[%s475] sm:$0xf] %vm1255, %v1251
      %1257 = vst.msk [vmem:[%s475 + $0x4] sm:$0xf] %vm1255, %v1252
      %1258 = vst.msk [vmem:[%s475 + $0x8] sm:$0xf] %vm1255, %v1253
      %1259 = vst.msk [vmem:[%s475 + $0xc] sm:$0xf] %vm1255, %v1254
      %p1260 = scmp.lt.s32.totalorder %s24, 15
      %s1261 = scalar_select %p1260, %s24, 15
      %s1262 = smul.addr %s1261, 4
      %s1263 = smul.addr %s1262, 4
      %s1264 = scalar_lea.vmem %s11, %s1263
      %p1265 = scmp.lt.s32.totalorder %s24, 15
      %s1266 = scalar_select %p1265, %s24, 15
      %s1267 = smul.addr %s1266, 4
      %s1268 = smul.addr %s1267, 8
      %s1269 = scalar_lea.vmem %s12, %s1268
      // Predicated region
      $region65: #{preact_block_forward.2} parent=63 // pred_check
        %p1270 = pneg %p292
      $region66: #{preact_block_forward.2} parent=63 // pred_check_branch
        %1272 = sbr.rel (%p1270) target = $region68
      $region67: #{preact_block_forward.2} parent=63 // pred_region
        _
      $region68: #{preact_block_forward.2} parent=63 // pred_fallthru
        _
      // Predicated region
      $region69: #{preact_block_forward.2} parent=63 // pred_check
        %p1273 = pneg %p318
      $region70: #{preact_block_forward.2} parent=63 // pred_check_branch
        %1275 = sbr.rel (%p1273) target = $region72
      $region71: #{preact_block_forward.2} parent=63 // pred_region
        _
      $region72: #{preact_block_forward.2} parent=63 // pred_fallthru
        _
    $region64: #{preact_block_forward.2} parent=5 // pred_fallthru
      _
    %p1276 = scmp.le.s32.totalorder 2, %s19
    // Predicated region
    $region73: #{preact_block_forward.2} parent=5 // pred_check
      %p1277 = pneg %p1276
    $region74: #{preact_block_forward.2} parent=5 // pred_check_branch
      %1279 = sbr.rel (%p1277) target = $region76
    $region75: #{preact_block_forward.2} parent=5 // pred_region
      %s1280 = ssub.s32 %s19, 2
      // Predicated region
      $region77: #{preact_block_forward.2} parent=75 // pred_check
        %p1281 = pneg %p298
      $region78: #{preact_block_forward.2} parent=75 // pred_check_branch
        %1283 = sbr.rel (%p1281) target = $region80
      $region79: #{preact_block_forward.2} parent=75 // pred_region
        %p1284 = scmp.lt.s32.totalorder %s25, 15
        %s1285 = scalar_select %p1284, %s25, 15
        %s1286 = smul.addr %s1285, 4
        %s1287 = smul.addr %s1286, 4
        %s1288 = scalar_lea.vmem %s11, %s1287
      $region80: #{preact_block_forward.2} parent=75 // pred_fallthru
        _
      // Predicated region
      $region81: #{preact_block_forward.2} parent=75 // pred_check
        %p1289 = pneg %p324
      $region82: #{preact_block_forward.2} parent=75 // pred_check_branch
        %1291 = sbr.rel (%p1289) target = $region84
      $region83: #{preact_block_forward.2} parent=75 // pred_region
        %p1292 = scmp.lt.s32.totalorder %s25, 15
        %s1293 = scalar_select %p1292, %s25, 15
        %s1294 = smul.addr %s1293, 4
        %s1295 = smul.addr %s1294, 8
        %s1296 = scalar_lea.vmem %s12, %s1295
      $region84: #{preact_block_forward.2} parent=75 // pred_fallthru
        _
    $region76: #{preact_block_forward.2} parent=5 // pred_fallthru
      _
  $region6: #{preact_block_forward.2} parent=0 // loop_footer
    %s23 = sadd.s32 1, %s19
  $region7: #{preact_block_forward.2} parent=0 // loop_footer_branch
    %18 = sbr.rel target = $region3
  $region8: #{preact_block_forward.2} parent=0 // loop_exit
    _

// kernel: preact_block_forward.3
$region0: #{preact_block_forward.3}
  #allocation0 [shape = 'u32[]', space=smem, size = 0x4, offset = 0x4, fixed_abs, tag = 'smem constant byte address 0x4 - core index']
  #allocation1 [shape = 'u32[72,128]{1,0:T(1,128)}', space=vmem, size = 0x9000, scoped, tag = 'internal scratch']
  %s0 = inlined_call_operand.vmem [shape: bf16[18,2,18,8], index: 0, kind: input, shape index: {}, may-alias: {0,1,2}]
  %s1 = inlined_call_operand.vmem [shape: bf16[18,2,18,8], index: 1, kind: input, shape index: {}, may-alias: {0,1,2}]
  %s2 = inlined_call_operand.vmem [shape: bf16[18,2,18,8], index: 2, kind: input, shape index: {}, may-alias: {0,1,2}]
  %s3 = inlined_call_operand.vmem [shape: bf16[9,8,8], index: 3, kind: input, shape index: {}]
  %s4 = inlined_call_operand.vmem [shape: f32[16,32,8], index: 4, kind: input, shape index: {}]
  %s5 = inlined_call_operand.vmem [shape: f32[16,32,8], index: 5, kind: output, shape index: {}]
  %s6 = sld [smem:[#allocation0]]
  $region53: #{preact_block_forward.3} parent=0
    _
  %s8 = ssub.s32 1, %s6
  %s9 = scalar_select 0, %s8, %s6
  loop: start=0, step=1, limit=18
  $region2: #{preact_block_forward.3} parent=0 // loop_pre_header
    _
  $region3: #{preact_block_forward.3} parent=0 // loop_header
    %s11 = sphi 0, %s15
    %p12 = scmp.ge.s32.totalorder %s11, 18
    %s21 = sphi 0, %s23
    %s24 = sphi 0, %s21
    %s25 = sphi 0, %s24
    %s41 = sphi 0, %s25
    %s49 = sphi 0, %s51
    %s52 = sphi 0, %s49
    %s53 = sphi 0, %s52
    %s69 = sphi 0, %s53
    %s77 = sphi 0, %s79
    %s80 = sphi 0, %s77
    %s81 = sphi 0, %s80
    %s97 = sphi 0, %s81
    %s101 = sphi 0, %s101
    %s103 = sphi 0, %s101
    %s104 = sphi 0, %s103
    %s118 = sphi 0, %s104
    %s124 = sphi 0, %s126
    %s127 = sphi 0, %s124
    %s128 = sphi 0, %s127
    %s144 = sphi 0, %s128
    %s150 = sphi 0, %s152
    %s153 = sphi 0, %s150
    %s154 = sphi 0, %s153
    %s170 = sphi 0, %s154
  $region4: #{preact_block_forward.3} parent=0 // loop_header_branch
    %14 = sbr.rel (%p12) target = $region8
  $region5: #{preact_block_forward.3} parent=0 // loop_body
    %s16 = ssub.s32 %s11, 1
    %s17 = ssub.s32 %s11, 2
    %s18 = sadd.s32 %s11, 1
    %s19 = ssub.s32 %s11, %s18
    %p20 = scmp.eq.s32.totalorder %s19, 0
    %s22 = sadd.s32 %s21, 1
    %s23 = scalar_select %p20, %s21, %s22
    %p26 = pneg %p20
    %p27 = scmp.eq.s32.totalorder %s11, 15
    %p28 = por %p26, %p27
    %p29 = scmp.ne.s32.totalorder %s21, %s24
    %p30 = scmp.eq.s32.totalorder %s11, 0
    %p31 = por %p29, %p30
    %p32 = scmp.ne.s32.totalorder %s21, %s24
    %p33 = scmp.eq.s32.totalorder %s16, 15
    %p34 = por %p32, %p33
    %p35 = scmp.ne.s32.totalorder %s24, %s25
    %p36 = scmp.eq.s32.totalorder %s16, 0
    %p37 = por %p35, %p36
    %p38 = scmp.ne.s32.totalorder %s24, %s25
    %p39 = scmp.eq.s32.totalorder %s17, 15
    %p40 = por %p38, %p39
    %p42 = scmp.ne.s32.totalorder %s25, %s41
    %p43 = scmp.eq.s32.totalorder %s17, 0
    %p44 = por %p42, %p43
    %s45 = sadd.s32 %s11, 1
    %s46 = sadd.s32 %s18, 1
    %s47 = ssub.s32 %s45, %s46
    %p48 = scmp.eq.s32.totalorder %s47, 0
    %s50 = sadd.s32 %s49, 1
    %s51 = scalar_select %p48, %s49, %s50
    %p54 = pneg %p48
    %p55 = scmp.eq.s32.totalorder %s11, 15
    %p56 = por %p54, %p55
    %p57 = scmp.ne.s32.totalorder %s49, %s52
    %p58 = scmp.eq.s32.totalorder %s11, 0
    %p59 = por %p57, %p58
    %p60 = scmp.ne.s32.totalorder %s49, %s52
    %p61 = scmp.eq.s32.totalorder %s16, 15
    %p62 = por %p60, %p61
    %p63 = scmp.ne.s32.totalorder %s52, %s53
    %p64 = scmp.eq.s32.totalorder %s16, 0
    %p65 = por %p63, %p64
    %p66 = scmp.ne.s32.totalorder %s52, %s53
    %p67 = scmp.eq.s32.totalorder %s17, 15
    %p68 = por %p66, %p67
    %p70 = scmp.ne.s32.totalorder %s53, %s69
    %p71 = scmp.eq.s32.totalorder %s17, 0
    %p72 = por %p70, %p71
    %s73 = sadd.s32 %s11, 2
    %s74 = sadd.s32 %s18, 2
    %s75 = ssub.s32 %s73, %s74
    %p76 = scmp.eq.s32.totalorder %s75, 0
    %s78 = sadd.s32 %s77, 1
    %s79 = scalar_select %p76, %s77, %s78
    %p82 = pneg %p76
    %p83 = scmp.eq.s32.totalorder %s11, 15
    %p84 = por %p82, %p83
    %p85 = scmp.ne.s32.totalorder %s77, %s80
    %p86 = scmp.eq.s32.totalorder %s11, 0
    %p87 = por %p85, %p86
    %p88 = scmp.ne.s32.totalorder %s77, %s80
    %p89 = scmp.eq.s32.totalorder %s16, 15
    %p90 = por %p88, %p89
    %p91 = scmp.ne.s32.totalorder %s80, %s81
    %p92 = scmp.eq.s32.totalorder %s16, 0
    %p93 = por %p91, %p92
    %p94 = scmp.ne.s32.totalorder %s80, %s81
    %p95 = scmp.eq.s32.totalorder %s17, 15
    %p96 = por %p94, %p95
    %p98 = scmp.ne.s32.totalorder %s81, %s97
    %p99 = scmp.eq.s32.totalorder %s17, 0
    %p100 = por %p98, %p99
    %s102 = sadd.s32 %s101, 1
    %p105 = scmp.eq.s32.totalorder %s11, 15
    %p106 = scmp.ne.s32.totalorder %s101, %s103
    %p107 = scmp.eq.s32.totalorder %s11, 0
    %p108 = por %p106, %p107
    %p109 = scmp.ne.s32.totalorder %s101, %s103
    %p110 = scmp.eq.s32.totalorder %s16, 15
    %p111 = por %p109, %p110
    %p112 = scmp.ne.s32.totalorder %s103, %s104
    %p113 = scmp.eq.s32.totalorder %s16, 0
    %p114 = por %p112, %p113
    %p115 = scmp.ne.s32.totalorder %s103, %s104
    %p116 = scmp.eq.s32.totalorder %s17, 15
    %p117 = por %p115, %p116
    %p119 = scmp.ne.s32.totalorder %s104, %s118
    %p120 = scmp.eq.s32.totalorder %s17, 0
    %p121 = por %p119, %p120
    %s122 = ssub.s32 %s11, %s18
    %p123 = scmp.eq.s32.totalorder %s122, 0
    %s125 = sadd.s32 %s124, 1
    %s126 = scalar_select %p123, %s124, %s125
    %p129 = pneg %p123
    %p130 = scmp.eq.s32.totalorder %s11, 15
    %p131 = por %p129, %p130
    %p132 = scmp.ne.s32.totalorder %s124, %s127
    %p133 = scmp.eq.s32.totalorder %s11, 0
    %p134 = por %p132, %p133
    %p135 = scmp.ne.s32.totalorder %s124, %s127
    %p136 = scmp.eq.s32.totalorder %s16, 15
    %p137 = por %p135, %p136
    %p138 = scmp.ne.s32.totalorder %s127, %s128
    %p139 = scmp.eq.s32.totalorder %s16, 0
    %p140 = por %p138, %p139
    %p141 = scmp.ne.s32.totalorder %s127, %s128
    %p142 = scmp.eq.s32.totalorder %s17, 15
    %p143 = por %p141, %p142
    %p145 = scmp.ne.s32.totalorder %s128, %s144
    %p146 = scmp.eq.s32.totalorder %s17, 0
    %p147 = por %p145, %p146
    %s148 = ssub.s32 %s11, %s18
    %p149 = scmp.eq.s32.totalorder %s148, 0
    %s151 = sadd.s32 %s150, 1
    %s152 = scalar_select %p149, %s150, %s151
    %p155 = pneg %p149
    %p156 = scmp.eq.s32.totalorder %s11, 15
    %p157 = por %p155, %p156
    %p158 = scmp.ne.s32.totalorder %s150, %s153
    %p159 = scmp.eq.s32.totalorder %s11, 0
    %p160 = por %p158, %p159
    %p161 = scmp.ne.s32.totalorder %s150, %s153
    %p162 = scmp.eq.s32.totalorder %s16, 15
    %p163 = por %p161, %p162
    %p164 = scmp.ne.s32.totalorder %s153, %s154
    %p165 = scmp.eq.s32.totalorder %s16, 0
    %p166 = por %p164, %p165
    %p167 = scmp.ne.s32.totalorder %s153, %s154
    %p168 = scmp.eq.s32.totalorder %s17, 15
    %p169 = por %p167, %p168
    %p171 = scmp.ne.s32.totalorder %s154, %s170
    %p172 = scmp.eq.s32.totalorder %s17, 0
    %p173 = por %p171, %p172
    %p174 = scmp.le.s32.totalorder 1, %s11
    %p175 = scmp.lt.s32.totalorder %s11, 17
    %p176 = pnand %p174, %p175
    %p177 = pneg %p176
    // Predicated region
    $region9: #{preact_block_forward.3} parent=5 // pred_check
      _
    $region10: #{preact_block_forward.3} parent=5 // pred_check_branch
      %179 = sbr.rel (%p176) target = $region12
    $region11: #{preact_block_forward.3} parent=5 // pred_region
      %s180 = ssub.s32 %s11, 1
      // Predicated region
      $region13: #{preact_block_forward.3} parent=11 // pred_check
        %p181 = pneg %p114
      $region14: #{preact_block_forward.3} parent=11 // pred_check_branch
        %183 = sbr.rel (%p181) target = $region16
      $region15: #{preact_block_forward.3} parent=11 // pred_region
        _
      $region16: #{preact_block_forward.3} parent=11 // pred_fallthru
        _
    $region12: #{preact_block_forward.3} parent=5 // pred_fallthru
      _
    %p184 = scmp.lt.s32.totalorder %s11, 16
    // Predicated region
    $region17: #{preact_block_forward.3} parent=5 // pred_check
      %p185 = pneg %p184
    $region18: #{preact_block_forward.3} parent=5 // pred_check_branch
      %187 = sbr.rel (%p185) target = $region20
    $region19: #{preact_block_forward.3} parent=5 // pred_region
      // Predicated region
      $region21: #{preact_block_forward.3} parent=19 // pred_check
        %p188 = pneg %p31
      $region22: #{preact_block_forward.3} parent=19 // pred_check_branch
        %190 = sbr.rel (%p188) target = $region24
      $region23: #{preact_block_forward.3} parent=19 // pred_region
        %p191 = scmp.lt.s32.totalorder %s11, 17
        %s192 = scalar_select %p191, %s11, 17
        %s193 = smul.addr %s192, 6
        %s194 = smul.addr %s193, 4
        %s195 = scalar_lea.vmem %s0, %s194
      $region24: #{preact_block_forward.3} parent=19 // pred_fallthru
        _
      // Predicated region
      $region25: #{preact_block_forward.3} parent=19 // pred_check
        %p196 = pneg %p59
      $region26: #{preact_block_forward.3} parent=19 // pred_check_branch
        %198 = sbr.rel (%p196) target = $region28
      $region27: #{preact_block_forward.3} parent=19 // pred_region
        %s199 = sadd.s32 %s11, 1
        %p200 = scmp.lt.s32.totalorder %s199, 17
        %s201 = scalar_select %p200, %s199, 17
        %s202 = smul.addr %s201, 6
        %s203 = smul.addr %s202, 4
        %s204 = scalar_lea.vmem %s1, %s203
        %s205 = sadd.s32 %s11, 1
      $region28: #{preact_block_forward.3} parent=19 // pred_fallthru
        _
      // Predicated region
      $region29: #{preact_block_forward.3} parent=19 // pred_check
        %p206 = pneg %p87
      $region30: #{preact_block_forward.3} parent=19 // pred_check_branch
        %208 = sbr.rel (%p206) target = $region32
      $region31: #{preact_block_forward.3} parent=19 // pred_region
        %s209 = sadd.s32 %s11, 2
        %p210 = scmp.lt.s32.totalorder %s209, 17
        %s211 = scalar_select %p210, %s209, 17
        %s212 = smul.addr %s211, 6
        %s213 = smul.addr %s212, 4
        %s214 = scalar_lea.vmem %s2, %s213
        %s215 = sadd.s32 %s11, 2
      $region32: #{preact_block_forward.3} parent=19 // pred_fallthru
        _
      // Predicated region
      $region33: #{preact_block_forward.3} parent=19 // pred_check
        %p216 = pneg %p134
      $region34: #{preact_block_forward.3} parent=19 // pred_check_branch
        %218 = sbr.rel (%p216) target = $region36
      $region35: #{preact_block_forward.3} parent=19 // pred_region
        %p219 = scmp.lt.s32.totalorder %s11, 15
        %s220 = scalar_select %p219, %s11, 15
        %s221 = smul.addr %s220, 4
        %s222 = smul.addr %s221, 8
        %s223 = scalar_lea.vmem %s4, %s222
      $region36: #{preact_block_forward.3} parent=19 // pred_fallthru
        _
    $region20: #{preact_block_forward.3} parent=5 // pred_fallthru
      _
    %p224 = scmp.le.s32.totalorder 1, %s11
    %p225 = scmp.lt.s32.totalorder %s11, 17
    %p226 = pnand %p224, %p225
    %p227 = pneg %p226
    // Predicated region
    $region37: #{preact_block_forward.3} parent=5 // pred_check
      _
    $region38: #{preact_block_forward.3} parent=5 // pred_check_branch
      %229 = sbr.rel (%p226) target = $region40
    $region39: #{preact_block_forward.3} parent=5 // pred_region
      %s230 = ssub.s32 %s11, 1
      %p231 = scmp.lt.s32.totalorder %s16, 17
      %s232 = scalar_select %p231, %s16, 17
      %s233 = smul.addr %s232, 6
      %s234 = smul.addr %s233, 4
      %s235 = scalar_lea.vmem %s0, %s234
      %p236 = pneg %p37
      %p237 = pneg %p34
      %s238 = sadd.s32 %s16, 1
      %p239 = scmp.lt.s32.totalorder %s238, 17
      %s240 = scalar_select %p239, %s238, 17
      %s241 = smul.addr %s240, 6
      %s242 = smul.addr %s241, 4
      %s243 = scalar_lea.vmem %s1, %s242
      %p244 = pneg %p65
      %p245 = pneg %p62
      %s246 = sadd.s32 %s16, 2
      %p247 = scmp.lt.s32.totalorder %s246, 17
      %s248 = scalar_select %p247, %s246, 17
      %s249 = smul.addr %s248, 6
      %s250 = smul.addr %s249, 4
      %s251 = scalar_lea.vmem %s2, %s250
      %p252 = pneg %p93
      %p253 = pneg %p90
      %p254 = pneg %p114
      %p255 = pneg %p111
      %p256 = scmp.lt.s32.totalorder %s16, 15
      %s257 = scalar_select %p256, %s16, 15
      %s258 = smul.addr %s257, 4
      %s259 = smul.addr %s258, 8
      %s260 = scalar_lea.vmem %s4, %s259
      %p261 = pneg %p140
      %p262 = pneg %p137
      %p263 = pneg %p166
      %p264 = pneg %p163
      %p265 = scmp.lt.s32.totalorder %s16, 15
      %s266 = scalar_select %p265, %s16, 15
      %s267 = smul.addr %s266, 4
      %s268 = smul.addr %s267, 8
      %s269 = scalar_lea.vmem %s5, %s268
      %p270 = scmp.lt.s32.totalorder %s16, 17
      %s271 = scalar_select %p270, %s16, 17
      %s272 = smul.addr %s271, 6
      %s273 = smul.addr %s272, 4
      %s274 = scalar_lea.vmem %s0, %s273
      %s275 = sadd.s32 %s16, 1
      %p276 = scmp.lt.s32.totalorder %s275, 17
      %s277 = scalar_select %p276, %s275, 17
      %s278 = smul.addr %s277, 6
      %s279 = smul.addr %s278, 4
      %s280 = scalar_lea.vmem %s1, %s279
      %s281 = sadd.s32 %s16, 1
      %s282 = sadd.s32 %s16, 2
      %p283 = scmp.lt.s32.totalorder %s282, 17
      %s284 = scalar_select %p283, %s282, 17
      %s285 = smul.addr %s284, 6
      %s286 = smul.addr %s285, 4
      %s287 = scalar_lea.vmem %s2, %s286
      %s288 = sadd.s32 %s16, 2
      %p289 = scmp.lt.s32.totalorder %s16, 15
      %s290 = scalar_select %p289, %s16, 15
      %s291 = smul.addr %s290, 4
      %s292 = smul.addr %s291, 8
      %s293 = scalar_lea.vmem %s4, %s292
      %p294 = scmp.lt.s32.totalorder %s16, 15
      %s295 = scalar_select %p294, %s16, 15
      %s296 = smul.addr %s295, 4
      %s297 = smul.addr %s296, 8
      %s298 = scalar_lea.vmem %s5, %s297
      %v300 = vld [vmem:[%s293] sm:$0xff]
      %v301 = vld [vmem:[%s293 + $0x8] sm:$0xff]
      %v302 = vld [vmem:[%s293 + $0x10] sm:$0xff]
      %v303 = vld [vmem:[%s293 + $0x18] sm:$0xff]
      %v304 = vld [vmem:[%s274] sm:$0xf]
      %v305 = vld [vmem:[%s274 + $0x4] sm:$0xf]
      %v306 = vld [vmem:[%s274 + $0x8] sm:$0x1]
      %v307 = vld [vmem:[%s274 + $0xc] sm:$0xf]
      %v308 = vld [vmem:[%s274 + $0x10] sm:$0xf]
      %v309 = vld [vmem:[%s274 + $0x14] sm:$0x1]
      %v310 = vld [vmem:[%s3] sm:$0xf]
      %v315 = vunpack.c.l.b16 %v304
      %v316 = vunpack.c.l.b16 %v305
      %v317 = vunpack.c.l.b16 %v307
      %v318 = vunpack.c.l.b16 %v308
      %v319 = vpack.c.b16 %v316, %v315
      %v320 = vpack.c.b16 %v318, %v317
      %vm321 = vcmask 64512
      %v323 = vsel %vm321, %v319, 0
      %v326 = vsel %vm321, %v320, 0
      %vm328 = vcmask 1043456
      %v330 = vsel %vm328, %v310, 0
      %332 = vmatpush.bf16.msra.mxu0 0
      %333 = vmatpush.bf16.msra.mxu0 0
      %334 = vmatpush.bf16.msra.mxu0 0
      %335 = vmatpush.bf16.msra.mxu0 0
      %336 = vmatpush.bf16.msra.mxu0 0
      %337 = vmatpush.bf16.msra.mxu0 0
      %338 = vmatpush.bf16.msra.mxu0 0
      %339 = vmatpush.bf16.msra.mxu0 %v330
      %340 = vmatmul.bf16.gmra.mxu0 %v323
      %v341 = vpop.f32.mrf.mxu0
      %v342 = vadd.f32 0.0, %v341
      %v343 = vpop.f32.mrf.mxu0
      %v344 = vadd.f32 0.0, %v343
      %345 = vmatmul.bf16.gmra.mxu0 %v326
      %v346 = vpop.f32.mrf.mxu0
      %v347 = vadd.f32 0.0, %v346
      %v348 = vpop.f32.mrf.mxu0
      %v349 = vadd.f32 0.0, %v348
      %350 = vdwg.mxu0
      %v351 = vadd.f32 %v300, %v342
      %v352 = vadd.f32 %v301, %v344
      %v353 = vadd.f32 %v302, %v347
      %v354 = vadd.f32 %v303, %v349
      %vm355 = vsmask.f32 3328
      %vm356 = vsmask.f32 7440
      %vm357 = vmor %vm355, %vm356
      %v359 = vshrl.u32 %v304, 16
      %v361 = vrot.slane %v359, 4
      %v362 = vshll.u32 %v304, 16
      %v364 = vrot.slane %v362, 5
      %v365 = vor.u32 %v361, %v364
      %v366 = vrot.slane %v365, 4
      %v368 = vshll.u32 %v305, 16
      %v370 = vrot.slane %v368, 5
      %v371 = vsel %vm357, %v366, %v370
      %v372 = vshrl.u32 %v305, 16
      %v374 = vrot.slane %v372, 4
      %v375 = vor.u32 %v374, %v370
      %v376 = vrot.slane %v375, 4
      %v378 = vshll.u32 %v306, 16
      %v380 = vrot.slane %v378, 5
      %v381 = vsel %vm357, %v376, %v380
      %v383 = vshrl.u32 %v307, 16
      %v385 = vrot.slane %v383, 4
      %v386 = vshll.u32 %v307, 16
      %v388 = vrot.slane %v386, 5
      %v389 = vor.u32 %v385, %v388
      %v390 = vrot.slane %v389, 4
      %v392 = vshll.u32 %v308, 16
      %v394 = vrot.slane %v392, 5
      %v395 = vsel %vm357, %v390, %v394
      %v396 = vshrl.u32 %v308, 16
      %v398 = vrot.slane %v396, 4
      %v399 = vor.u32 %v398, %v394
      %v400 = vrot.slane %v399, 4
      %v402 = vshll.u32 %v309, 16
      %v404 = vrot.slane %v402, 5
      %v405 = vsel %vm357, %v400, %v404
      %s406 = scalar_lea.vmem %s3, 4
      %v407 = vld [vmem:[%s406] sm:$0xf]
      %v408 = vunpack.c.l.b16 %v371
      %v409 = vunpack.c.l.b16 %v381
      %v410 = vunpack.c.l.b16 %v395
      %v411 = vunpack.c.l.b16 %v405
      %v412 = vpack.c.b16 %v409, %v408
      %v413 = vpack.c.b16 %v411, %v410
      %v415 = vsel %vm321, %v412, 0
      %v418 = vsel %vm321, %v413, 0
      %v421 = vsel %vm328, %v407, 0
      %423 = vmatpush.bf16.msra.mxu0 0
      %424 = vmatpush.bf16.msra.mxu0 0
      %425 = vmatpush.bf16.msra.mxu0 0
      %426 = vmatpush.bf16.msra.mxu0 0
      %427 = vmatpush.bf16.msra.mxu0 0
      %428 = vmatpush.bf16.msra.mxu0 0
      %429 = vmatpush.bf16.msra.mxu0 0
      %430 = vmatpush.bf16.msra.mxu0 %v421
      %431 = vmatmul.bf16.gmra.mxu0 %v415
      %v432 = vpop.f32.mrf.mxu0
      %v433 = vadd.f32 0.0, %v432
      %v434 = vpop.f32.mrf.mxu0
      %v435 = vadd.f32 0.0, %v434
      %436 = vmatmul.bf16.gmra.mxu0 %v418
      %v437 = vpop.f32.mrf.mxu0
      %v438 = vadd.f32 0.0, %v437
      %v439 = vpop.f32.mrf.mxu0
      %v440 = vadd.f32 0.0, %v439
      %441 = vdwg.mxu0
      %v442 = vadd.f32 %v351, %v433
      %v443 = vadd.f32 %v352, %v435
      %v444 = vadd.f32 %v353, %v438
      %v445 = vadd.f32 %v354, %v440
      %vm448 = vcmask 1042432
      %vm449 = vcmask 1046532
      %vm450 = vmor %vm448, %vm449
      %v451 = vrot.slane %v304, 5
      %v452 = vrot.slane %v451, 4
      %v453 = vrot.slane %v305, 5
      %v454 = vsel %vm450, %v452, %v453
      %v455 = vrot.slane %v453, 4
      %v456 = vrot.slane %v306, 5
      %v457 = vsel %vm450, %v455, %v456
      %v458 = vrot.slane %v307, 5
      %v459 = vrot.slane %v458, 4
      %v460 = vrot.slane %v308, 5
      %v461 = vsel %vm450, %v459, %v460
      %v462 = vrot.slane %v460, 4
      %v463 = vrot.slane %v309, 5
      %v464 = vsel %vm450, %v462, %v463
      %s465 = scalar_lea.vmem %s3, 8
      %v466 = vld [vmem:[%s465] sm:$0xf]
      %v467 = vunpack.c.l.b16 %v454
      %v468 = vunpack.c.l.b16 %v457
      %v469 = vunpack.c.l.b16 %v461
      %v470 = vunpack.c.l.b16 %v464
      %v471 = vpack.c.b16 %v468, %v467
      %v472 = vpack.c.b16 %v470, %v469
      %v474 = vsel %vm321, %v471, 0
      %v477 = vsel %vm321, %v472, 0
      %v480 = vsel %vm328, %v466, 0
      %482 = vmatpush.bf16.msra.mxu0 0
      %483 = vmatpush.bf16.msra.mxu0 0
      %484 = vmatpush.bf16.msra.mxu0 0
      %485 = vmatpush.bf16.msra.mxu0 0
      %486 = vmatpush.bf16.msra.mxu0 0
      %487 = vmatpush.bf16.msra.mxu0 0
      %488 = vmatpush.bf16.msra.mxu0 0
      %489 = vmatpush.bf16.msra.mxu0 %v480
      %490 = vmatmul.bf16.gmra.mxu0 %v474
      %v491 = vpop.f32.mrf.mxu0
      %v492 = vadd.f32 0.0, %v491
      %v493 = vpop.f32.mrf.mxu0
      %v494 = vadd.f32 0.0, %v493
      %495 = vmatmul.bf16.gmra.mxu0 %v477
      %v496 = vpop.f32.mrf.mxu0
      %v497 = vadd.f32 0.0, %v496
      %v498 = vpop.f32.mrf.mxu0
      %v499 = vadd.f32 0.0, %v498
      %500 = vdwg.mxu0
      %v501 = vadd.f32 %v442, %v492
      %v502 = vadd.f32 %v443, %v494
      %v503 = vadd.f32 %v444, %v497
      %v504 = vadd.f32 %v445, %v499
      %v505 = vld [vmem:[%s280] sm:$0xf]
      %v506 = vld [vmem:[%s280 + $0x4] sm:$0xf]
      %v507 = vld [vmem:[%s280 + $0x8] sm:$0x1]
      %v508 = vld [vmem:[%s280 + $0xc] sm:$0xf]
      %v509 = vld [vmem:[%s280 + $0x10] sm:$0xf]
      %v510 = vld [vmem:[%s280 + $0x14] sm:$0x1]
      %s511 = scalar_lea.vmem %s3, 12
      %v512 = vld [vmem:[%s511] sm:$0xf]
      %v517 = vunpack.c.l.b16 %v505
      %v518 = vunpack.c.l.b16 %v506
      %v519 = vunpack.c.l.b16 %v508
      %v520 = vunpack.c.l.b16 %v509
      %v521 = vpack.c.b16 %v518, %v517
      %v522 = vpack.c.b16 %v520, %v519
      %v524 = vsel %vm321, %v521, 0
      %v527 = vsel %vm321, %v522, 0
      %v530 = vsel %vm328, %v512, 0
      %532 = vmatpush.bf16.msra.mxu0 0
      %533 = vmatpush.bf16.msra.mxu0 0
      %534 = vmatpush.bf16.msra.mxu0 0
      %535 = vmatpush.bf16.msra.mxu0 0
      %536 = vmatpush.bf16.msra.mxu0 0
      %537 = vmatpush.bf16.msra.mxu0 0
      %538 = vmatpush.bf16.msra.mxu0 0
      %539 = vmatpush.bf16.msra.mxu0 %v530
      %540 = vmatmul.bf16.gmra.mxu0 %v524
      %v541 = vpop.f32.mrf.mxu0
      %v542 = vadd.f32 0.0, %v541
      %v543 = vpop.f32.mrf.mxu0
      %v544 = vadd.f32 0.0, %v543
      %545 = vmatmul.bf16.gmra.mxu0 %v527
      %v546 = vpop.f32.mrf.mxu0
      %v547 = vadd.f32 0.0, %v546
      %v548 = vpop.f32.mrf.mxu0
      %v549 = vadd.f32 0.0, %v548
      %550 = vdwg.mxu0
      %v551 = vadd.f32 %v501, %v542
      %v552 = vadd.f32 %v502, %v544
      %v553 = vadd.f32 %v503, %v547
      %v554 = vadd.f32 %v504, %v549
      %v556 = vshrl.u32 %v505, 16
      %v558 = vrot.slane %v556, 4
      %v559 = vshll.u32 %v505, 16
      %v561 = vrot.slane %v559, 5
      %v562 = vor.u32 %v558, %v561
      %v563 = vrot.slane %v562, 4
      %v565 = vshll.u32 %v506, 16
      %v567 = vrot.slane %v565, 5
      %v568 = vsel %vm357, %v563, %v567
      %v569 = vshrl.u32 %v506, 16
      %v571 = vrot.slane %v569, 4
      %v572 = vor.u32 %v571, %v567
      %v573 = vrot.slane %v572, 4
      %v575 = vshll.u32 %v507, 16
      %v577 = vrot.slane %v575, 5
      %v578 = vsel %vm357, %v573, %v577
      %v580 = vshrl.u32 %v508, 16
      %v582 = vrot.slane %v580, 4
      %v583 = vshll.u32 %v508, 16
      %v585 = vrot.slane %v583, 5
      %v586 = vor.u32 %v582, %v585
      %v587 = vrot.slane %v586, 4
      %v589 = vshll.u32 %v509, 16
      %v591 = vrot.slane %v589, 5
      %v592 = vsel %vm357, %v587, %v591
      %v593 = vshrl.u32 %v509, 16
      %v595 = vrot.slane %v593, 4
      %v596 = vor.u32 %v595, %v591
      %v597 = vrot.slane %v596, 4
      %v599 = vshll.u32 %v510, 16
      %v601 = vrot.slane %v599, 5
      %v602 = vsel %vm357, %v597, %v601
      %s603 = scalar_lea.vmem %s3, 16
      %v604 = vld [vmem:[%s603] sm:$0xf]
      %v605 = vunpack.c.l.b16 %v568
      %v606 = vunpack.c.l.b16 %v578
      %v607 = vunpack.c.l.b16 %v592
      %v608 = vunpack.c.l.b16 %v602
      %v609 = vpack.c.b16 %v606, %v605
      %v610 = vpack.c.b16 %v608, %v607
      %v612 = vsel %vm321, %v609, 0
      %v615 = vsel %vm321, %v610, 0
      %v618 = vsel %vm328, %v604, 0
      %620 = vmatpush.bf16.msra.mxu0 0
      %621 = vmatpush.bf16.msra.mxu0 0
      %622 = vmatpush.bf16.msra.mxu0 0
      %623 = vmatpush.bf16.msra.mxu0 0
      %624 = vmatpush.bf16.msra.mxu0 0
      %625 = vmatpush.bf16.msra.mxu0 0
      %626 = vmatpush.bf16.msra.mxu0 0
      %627 = vmatpush.bf16.msra.mxu0 %v618
      %628 = vmatmul.bf16.gmra.mxu0 %v612
      %v629 = vpop.f32.mrf.mxu0
      %v630 = vadd.f32 0.0, %v629
      %v631 = vpop.f32.mrf.mxu0
      %v632 = vadd.f32 0.0, %v631
      %633 = vmatmul.bf16.gmra.mxu0 %v615
      %v634 = vpop.f32.mrf.mxu0
      %v635 = vadd.f32 0.0, %v634
      %v636 = vpop.f32.mrf.mxu0
      %v637 = vadd.f32 0.0, %v636
      %638 = vdwg.mxu0
      %v639 = vadd.f32 %v551, %v630
      %v640 = vadd.f32 %v552, %v632
      %v641 = vadd.f32 %v553, %v635
      %v642 = vadd.f32 %v554, %v637
      %v645 = vrot.slane %v505, 5
      %v646 = vrot.slane %v645, 4
      %v647 = vrot.slane %v506, 5
      %v648 = vsel %vm450, %v646, %v647
      %v649 = vrot.slane %v647, 4
      %v650 = vrot.slane %v507, 5
      %v651 = vsel %vm450, %v649, %v650
      %v652 = vrot.slane %v508, 5
      %v653 = vrot.slane %v652, 4
      %v654 = vrot.slane %v509, 5
      %v655 = vsel %vm450, %v653, %v654
      %v656 = vrot.slane %v654, 4
      %v657 = vrot.slane %v510, 5
      %v658 = vsel %vm450, %v656, %v657
      %s659 = scalar_lea.vmem %s3, 20
      %v660 = vld [vmem:[%s659] sm:$0xf]
      %v661 = vunpack.c.l.b16 %v648
      %v662 = vunpack.c.l.b16 %v651
      %v663 = vunpack.c.l.b16 %v655
      %v664 = vunpack.c.l.b16 %v658
      %v665 = vpack.c.b16 %v662, %v661
      %v666 = vpack.c.b16 %v664, %v663
      %v668 = vsel %vm321, %v665, 0
      %v671 = vsel %vm321, %v666, 0
      %v674 = vsel %vm328, %v660, 0
      %676 = vmatpush.bf16.msra.mxu0 0
      %677 = vmatpush.bf16.msra.mxu0 0
      %678 = vmatpush.bf16.msra.mxu0 0
      %679 = vmatpush.bf16.msra.mxu0 0
      %680 = vmatpush.bf16.msra.mxu0 0
      %681 = vmatpush.bf16.msra.mxu0 0
      %682 = vmatpush.bf16.msra.mxu0 0
      %683 = vmatpush.bf16.msra.mxu0 %v674
      %684 = vmatmul.bf16.gmra.mxu0 %v668
      %v685 = vpop.f32.mrf.mxu0
      %v686 = vadd.f32 0.0, %v685
      %v687 = vpop.f32.mrf.mxu0
      %v688 = vadd.f32 0.0, %v687
      %689 = vmatmul.bf16.gmra.mxu0 %v671
      %v690 = vpop.f32.mrf.mxu0
      %v691 = vadd.f32 0.0, %v690
      %v692 = vpop.f32.mrf.mxu0
      %v693 = vadd.f32 0.0, %v692
      %694 = vdwg.mxu0
      %v695 = vadd.f32 %v639, %v686
      %v696 = vadd.f32 %v640, %v688
      %v697 = vadd.f32 %v641, %v691
      %v698 = vadd.f32 %v642, %v693
      %v699 = vld [vmem:[%s287] sm:$0xf]
      %v700 = vld [vmem:[%s287 + $0x4] sm:$0xf]
      %v701 = vld [vmem:[%s287 + $0x8] sm:$0x1]
      %v702 = vld [vmem:[%s287 + $0xc] sm:$0xf]
      %v703 = vld [vmem:[%s287 + $0x10] sm:$0xf]
      %v704 = vld [vmem:[%s287 + $0x14] sm:$0x1]
      %s705 = scalar_lea.vmem %s3, 24
      %v706 = vld [vmem:[%s705] sm:$0xf]
      %v711 = vunpack.c.l.b16 %v699
      %v712 = vunpack.c.l.b16 %v700
      %v713 = vunpack.c.l.b16 %v702
      %v714 = vunpack.c.l.b16 %v703
      %v715 = vpack.c.b16 %v712, %v711
      %v716 = vpack.c.b16 %v714, %v713
      %v718 = vsel %vm321, %v715, 0
      %v721 = vsel %vm321, %v716, 0
      %v724 = vsel %vm328, %v706, 0
      %726 = vmatpush.bf16.msra.mxu0 0
      %727 = vmatpush.bf16.msra.mxu0 0
      %728 = vmatpush.bf16.msra.mxu0 0
      %729 = vmatpush.bf16.msra.mxu0 0
      %730 = vmatpush.bf16.msra.mxu0 0
      %731 = vmatpush.bf16.msra.mxu0 0
      %732 = vmatpush.bf16.msra.mxu0 0
      %733 = vmatpush.bf16.msra.mxu0 %v724
      %734 = vmatmul.bf16.gmra.mxu0 %v718
      %v735 = vpop.f32.mrf.mxu0
      %v736 = vadd.f32 0.0, %v735
      %v737 = vpop.f32.mrf.mxu0
      %v738 = vadd.f32 0.0, %v737
      %739 = vmatmul.bf16.gmra.mxu0 %v721
      %v740 = vpop.f32.mrf.mxu0
      %v741 = vadd.f32 0.0, %v740
      %v742 = vpop.f32.mrf.mxu0
      %v743 = vadd.f32 0.0, %v742
      %744 = vdwg.mxu0
      %v745 = vadd.f32 %v695, %v736
      %v746 = vadd.f32 %v696, %v738
      %v747 = vadd.f32 %v697, %v741
      %v748 = vadd.f32 %v698, %v743
      %v750 = vshrl.u32 %v699, 16
      %v752 = vrot.slane %v750, 4
      %v753 = vshll.u32 %v699, 16
      %v755 = vrot.slane %v753, 5
      %v756 = vor.u32 %v752, %v755
      %v757 = vrot.slane %v756, 4
      %v759 = vshll.u32 %v700, 16
      %v761 = vrot.slane %v759, 5
      %v762 = vsel %vm357, %v757, %v761
      %v763 = vshrl.u32 %v700, 16
      %v765 = vrot.slane %v763, 4
      %v766 = vor.u32 %v765, %v761
      %v767 = vrot.slane %v766, 4
      %v769 = vshll.u32 %v701, 16
      %v771 = vrot.slane %v769, 5
      %v772 = vsel %vm357, %v767, %v771
      %v774 = vshrl.u32 %v702, 16
      %v776 = vrot.slane %v774, 4
      %v777 = vshll.u32 %v702, 16
      %v779 = vrot.slane %v777, 5
      %v780 = vor.u32 %v776, %v779
      %v781 = vrot.slane %v780, 4
      %v783 = vshll.u32 %v703, 16
      %v785 = vrot.slane %v783, 5
      %v786 = vsel %vm357, %v781, %v785
      %v787 = vshrl.u32 %v703, 16
      %v789 = vrot.slane %v787, 4
      %v790 = vor.u32 %v789, %v785
      %v791 = vrot.slane %v790, 4
      %v793 = vshll.u32 %v704, 16
      %v795 = vrot.slane %v793, 5
      %v796 = vsel %vm357, %v791, %v795
      %s797 = scalar_lea.vmem %s3, 28
      %v798 = vld [vmem:[%s797] sm:$0xf]
      %v799 = vunpack.c.l.b16 %v762
      %v800 = vunpack.c.l.b16 %v772
      %v801 = vunpack.c.l.b16 %v786
      %v802 = vunpack.c.l.b16 %v796
      %v803 = vpack.c.b16 %v800, %v799
      %v804 = vpack.c.b16 %v802, %v801
      %v806 = vsel %vm321, %v803, 0
      %v809 = vsel %vm321, %v804, 0
      %v812 = vsel %vm328, %v798, 0
      %814 = vmatpush.bf16.msra.mxu0 0
      %815 = vmatpush.bf16.msra.mxu0 0
      %816 = vmatpush.bf16.msra.mxu0 0
      %817 = vmatpush.bf16.msra.mxu0 0
      %818 = vmatpush.bf16.msra.mxu0 0
      %819 = vmatpush.bf16.msra.mxu0 0
      %820 = vmatpush.bf16.msra.mxu0 0
      %821 = vmatpush.bf16.msra.mxu0 %v812
      %822 = vmatmul.bf16.gmra.mxu0 %v806
      %v823 = vpop.f32.mrf.mxu0
      %v824 = vadd.f32 0.0, %v823
      %v825 = vpop.f32.mrf.mxu0
      %v826 = vadd.f32 0.0, %v825
      %827 = vmatmul.bf16.gmra.mxu0 %v809
      %v828 = vpop.f32.mrf.mxu0
      %v829 = vadd.f32 0.0, %v828
      %v830 = vpop.f32.mrf.mxu0
      %v831 = vadd.f32 0.0, %v830
      %832 = vdwg.mxu0
      %v833 = vadd.f32 %v745, %v824
      %v834 = vadd.f32 %v746, %v826
      %v835 = vadd.f32 %v747, %v829
      %v836 = vadd.f32 %v748, %v831
      %v839 = vrot.slane %v699, 5
      %v840 = vrot.slane %v839, 4
      %v841 = vrot.slane %v700, 5
      %v842 = vsel %vm450, %v840, %v841
      %v843 = vrot.slane %v841, 4
      %v844 = vrot.slane %v701, 5
      %v845 = vsel %vm450, %v843, %v844
      %v846 = vrot.slane %v702, 5
      %v847 = vrot.slane %v846, 4
      %v848 = vrot.slane %v703, 5
      %v849 = vsel %vm450, %v847, %v848
      %v850 = vrot.slane %v848, 4
      %v851 = vrot.slane %v704, 5
      %v852 = vsel %vm450, %v850, %v851
      %s853 = scalar_lea.vmem %s3, 32
      %v854 = vld [vmem:[%s853] sm:$0xf]
      %v855 = vunpack.c.l.b16 %v842
      %v856 = vunpack.c.l.b16 %v845
      %v857 = vunpack.c.l.b16 %v849
      %v858 = vunpack.c.l.b16 %v852
      %v859 = vpack.c.b16 %v856, %v855
      %v860 = vpack.c.b16 %v858, %v857
      %v862 = vsel %vm321, %v859, 0
      %v865 = vsel %vm321, %v860, 0
      %v868 = vsel %vm328, %v854, 0
      %870 = vmatpush.bf16.msra.mxu0 0
      %871 = vmatpush.bf16.msra.mxu0 0
      %872 = vmatpush.bf16.msra.mxu0 0
      %873 = vmatpush.bf16.msra.mxu0 0
      %874 = vmatpush.bf16.msra.mxu0 0
      %875 = vmatpush.bf16.msra.mxu0 0
      %876 = vmatpush.bf16.msra.mxu0 0
      %877 = vmatpush.bf16.msra.mxu0 %v868
      %878 = vmatmul.bf16.gmra.mxu0 %v862
      %v879 = vpop.f32.mrf.mxu0
      %v880 = vadd.f32 0.0, %v879
      %v881 = vpop.f32.mrf.mxu0
      %v882 = vadd.f32 0.0, %v881
      %883 = vmatmul.bf16.gmra.mxu0 %v865
      %v884 = vpop.f32.mrf.mxu0
      %v885 = vadd.f32 0.0, %v884
      %v886 = vpop.f32.mrf.mxu0
      %v887 = vadd.f32 0.0, %v886
      %888 = vdwg.mxu0
      %v889 = vadd.f32 %v833, %v880
      %v890 = vadd.f32 %v834, %v882
      %v891 = vadd.f32 %v835, %v885
      %v892 = vadd.f32 %v836, %v887
      %893 = vst.msk [vmem:[%s298] sm:$0xff] %vm321, %v889
      %894 = vst.msk [vmem:[%s298 + $0x8] sm:$0xff] %vm321, %v890
      %895 = vst.msk [vmem:[%s298 + $0x10] sm:$0xff] %vm321, %v891
      %896 = vst.msk [vmem:[%s298 + $0x18] sm:$0xff] %vm321, %v892
      %p897 = scmp.lt.s32.totalorder %s16, 15
      %s898 = scalar_select %p897, %s16, 15
      %s899 = smul.addr %s898, 4
      %s900 = smul.addr %s899, 8
      %s901 = scalar_lea.vmem %s5, %s900
      // Predicated region
      $region41: #{preact_block_forward.3} parent=39 // pred_check
        %p902 = pneg %p163
      $region42: #{preact_block_forward.3} parent=39 // pred_check_branch
        %904 = sbr.rel (%p902) target = $region44
      $region43: #{preact_block_forward.3} parent=39 // pred_region
        _
      $region44: #{preact_block_forward.3} parent=39 // pred_fallthru
        _
    $region40: #{preact_block_forward.3} parent=5 // pred_fallthru
      _
    %p905 = scmp.le.s32.totalorder 2, %s11
    // Predicated region
    $region45: #{preact_block_forward.3} parent=5 // pred_check
      %p906 = pneg %p905
    $region46: #{preact_block_forward.3} parent=5 // pred_check_branch
      %908 = sbr.rel (%p906) target = $region48
    $region47: #{preact_block_forward.3} parent=5 // pred_region
      %s909 = ssub.s32 %s11, 2
      // Predicated region
      $region49: #{preact_block_forward.3} parent=47 // pred_check
        %p910 = pneg %p169
      $region50: #{preact_block_forward.3} parent=47 // pred_check_branch
        %912 = sbr.rel (%p910) target = $region52
      $region51: #{preact_block_forward.3} parent=47 // pred_region
        %p913 = scmp.lt.s32.totalorder %s17, 15
        %s914 = scalar_select %p913, %s17, 15
        %s915 = smul.addr %s914, 4
        %s916 = smul.addr %s915, 8
        %s917 = scalar_lea.vmem %s5, %s916
      $region52: #{preact_block_forward.3} parent=47 // pred_fallthru
        _
    $region48: #{preact_block_forward.3} parent=5 // pred_fallthru
      _
  $region6: #{preact_block_forward.3} parent=0 // loop_footer
    %s15 = sadd.s32 1, %s11
  $region7: #{preact_block_forward.3} parent=0 // loop_footer_branch
    %10 = sbr.rel target = $region3
  $region8: #{preact_block_forward.3} parent=0 // loop_exit
    _

</llo_original>
